<compile_context>
chip_gen: v6e
topology: v6e:2x2x1
jax: 0.10.0
libtpu: 0.0.40
codegen_flags: <defaults>
</compile_context>

<pallas_src>
import functools

import jax
import jax.numpy as jnp
from jax.experimental import pallas as pl
from jax.experimental.pallas import tpu as pltpu

# Finite "-inf": exp() underflows to 0 and never produces NaN. Safe here because with causal
# masking the first visited KV tile (ki == 0) always contains >= 1 unmasked column per row.
# Do NOT reuse this kernel for arbitrary key-padding / non-causal masks without a guard.
_NEG_INF = -1e30


def _round_up(x, m):
    return ((x + m - 1) // m) * m


def _pick_tile(dim, target=256):
    """Tile satisfying the (8,128) BlockSpec rule; caller pads dims > 256 to a multiple of 128."""
    if dim <= target:
        return dim                      # full extent is always legal
    if dim % 256 == 0 and target >= 256:
        return 256
    assert dim % 128 == 0, "pad dims > 256 to a multiple of 128 before tiling"
    return 128


# ---------------------------------------------------------------------------------------
# Kernel 1: generic (M, N, K)-tiled matmul, bf16 operands, f32 VMEM accumulator, opt. bias.
# Used for both the fused QKV projection (no bias) and the output projection (bias).
# ---------------------------------------------------------------------------------------
def _matmul_kernel(*refs, has_bias):
    if has_bias:
        x_ref, w_ref, b_ref, o_ref, acc_ref = refs
    else:
        x_ref, w_ref, o_ref, acc_ref = refs
        b_ref = None

    @pl.when(pl.program_id(2) == 0)
    def _init():
        acc_ref[...] = jnp.zeros_like(acc_ref)

    acc_ref[...] += jnp.dot(x_ref[...], w_ref[...],
                            preferred_element_type=jnp.float32)

    @pl.when(pl.program_id(2) == pl.num_programs(2) - 1)
    def _store():
        r = acc_ref[...]
        if has_bias:
            r = r + b_ref[...]
        o_ref[...] = r.astype(o_ref.dtype)


def _tiled_matmul(x2d, w, bias=None, out_dtype=jnp.bfloat16):
    """out = x2d @ w (+ bias). Operands cast to bf16 for the MXU; accumulation in f32."""
    M, K = x2d.shape
    _, N = w.shape

    # Pad dims > 256 to a multiple of 128 so we never use a huge full-extent tile (VMEM cliff).
    Mp = M if M <= 256 else _round_up(M, 128)
    Kp = K if K <= 256 else _round_up(K, 128)
    Np = N if N <= 256 else _round_up(N, 128)
    x2d = x2d.astype(jnp.bfloat16)
    w = w.astype(jnp.bfloat16)
    if (Mp, Kp) != (M, K):
        x2d = jnp.pad(x2d, ((0, Mp - M), (0, Kp - K)))
    if (Kp, Np) != (K, N):
        w = jnp.pad(w, ((0, Kp - K), (0, Np - N)))

    tm = _pick_tile(Mp)
    tk = _pick_tile(Kp)
    tn = _pick_tile(Np)

    has_bias = bias is not None
    inputs = [x2d, w]
    in_specs = [
        pl.BlockSpec((tm, tk), lambda i, j, k: (i, k)),
        pl.BlockSpec((tk, tn), lambda i, j, k: (k, j)),
    ]
    if has_bias:
        b = bias.reshape(1, N).astype(jnp.float32)
        if Np != N:
            b = jnp.pad(b, ((0, 0), (0, Np - N)))
        inputs.append(b)
        in_specs.append(pl.BlockSpec((1, tn), lambda i, j, k: (0, j)))

    out = pl.pallas_call(
        functools.partial(_matmul_kernel, has_bias=has_bias),
        out_shape=jax.ShapeDtypeStruct((Mp, Np), out_dtype),
        grid_spec=pltpu.PrefetchScalarGridSpec(
            num_scalar_prefetch=0,
            grid=(Mp // tm, Np // tn, Kp // tk),
            in_specs=in_specs,
            out_specs=pl.BlockSpec((tm, tn), lambda i, j, k: (i, j)),
            scratch_shapes=[pltpu.VMEM((tm, tn), jnp.float32)],
        ),
        compiler_params=pltpu.CompilerParams(
            dimension_semantics=("parallel", "parallel", "arbitrary")),
    )(*inputs)
    if (Mp, Np) != (M, N):
        out = out[:M, :N]
    return out


# ---------------------------------------------------------------------------------------
# Kernel 2: causal flash attention over KV tiles, all heads per step, (B, T, C) output.
# ---------------------------------------------------------------------------------------
def _flash_attn_kernel(*refs, n_heads, head_size, tq, q_off, k_off, v_off, has_mask):
    if has_mask:
        q_ref, k_ref, v_ref, mask_ref, o_ref, m_sc, l_sc, acc_sc = refs
    else:
        q_ref, k_ref, v_ref, o_ref, m_sc, l_sc, acc_sc = refs
        mask_ref = None

    qi = pl.program_id(1)
    ki = pl.program_id(2)
    nkv = pl.num_programs(2)

    @pl.when(ki == 0)
    def _init():
        m_sc[...] = jnp.full_like(m_sc, _NEG_INF)
        l_sc[...] = jnp.zeros_like(l_sc)
        acc_sc[...] = jnp.zeros_like(acc_sc)

    # Above-diagonal kv tiles are skipped entirely; their K/V DMA is also elided because the
    # clamped index_maps map them onto the diagonal block (tq == tkv).
    @pl.when(ki <= qi)
    def _compute():
        q_full = q_ref[0]   # bf16, (tq, C) or (tq, 3C); Q scale already folded into Wq
        k_full = k_ref[0]
        v_full = v_ref[0]
        row = qi * tq + jax.lax.broadcasted_iota(jnp.int32, (tq, tq), 0)
        col = ki * tq + jax.lax.broadcasted_iota(jnp.int32, (tq, tq), 1)
        causal = col <= row
        # TODO(synk): for n_heads >= 16 or head_size >= 128, move heads to a leading ref/grid axis
        # instead of lane slices to avoid XLU shuffles and vreg pressure.
        for h in range(n_heads):
            qs = q_full[:, q_off + h * head_size: q_off + (h + 1) * head_size]
            ks = k_full[:, k_off + h * head_size: k_off + (h + 1) * head_size]
            vs = v_full[:, v_off + h * head_size: v_off + (h + 1) * head_size]
            # bf16 MXU matmul (f32 accumulate); contract on the head dim (no explicit transpose).
            s = jax.lax.dot_general(
                qs, ks, dimension_numbers=(((1,), (1,)), ((), ())),
                preferred_element_type=jnp.float32)                    # (tq, tq)
            s = jnp.where(causal, s, _NEG_INF)
            m_prev = m_sc[h]                                           # (tq, 1)
            m_new = jnp.maximum(m_prev, jnp.max(s, axis=-1, keepdims=True))
            alpha = jnp.exp(m_prev - m_new)
            p = jnp.exp(s - m_new)
            l_sc[h] = alpha * l_sc[h] + jnp.sum(p, axis=-1, keepdims=True)
            acc_sc[h] = alpha * acc_sc[h] + jnp.dot(
                p.astype(vs.dtype), vs, preferred_element_type=jnp.float32)
            m_sc[h] = m_new

    @pl.when(ki == nkv - 1)
    def _finalize():
        outs = []
        for h in range(n_heads):
            inv_l = pl.reciprocal(l_sc[h], approx=True)                # EUP slot, nearly free
            outs.append(acc_sc[h] * inv_l)                             # (tq, head_size)
        out_full = jnp.concatenate(outs, axis=-1)                      # (tq, C) lane-dense slab
        if has_mask:
            out_full = jnp.where(mask_ref[0] == 0, 0.0, out_full)      # fused output mask
        o_ref[0] = out_full.astype(o_ref.dtype)


# ---------------------------------------------------------------------------------------
# Wrapper
# ---------------------------------------------------------------------------------------
def multi_head_atten(x, params, attention_mask=None):
    """Forward pass of MultiHeadAtten (eval mode; dropout = identity).

    x: (B, T, C) float32.
    params: dict with
        'wq','wk','wv': (n_heads, C, head_size)   (pre-transposed: y = x @ w)
        'w_proj':       (C, C)                    (pre-transposed: y = x @ w_proj + b)
        'b_proj':       (C,)
    attention_mask: optional (B, T) or (B, T, 1); zeros zero-out the attention OUTPUT
                    (matching the PyTorch module's masked_fill on `attention`).
    """
    B, T, C = x.shape
    n_heads, _, head_size = params["wq"].shape
    assert n_heads * head_size == C, "proj expects n_heads*head_size == embd_dim"
    M = B * T

    # Stack per-head weights along the output dim (head h owns lanes [h*hs, (h+1)*hs)) and fold
    # the 1/sqrt(head_size) attention scale into the Q weight at trace time.
    scale = float(head_size) ** -0.5
    wq = jnp.transpose(params["wq"], (1, 0, 2)).reshape(C, C) * scale
    wk = jnp.transpose(params["wk"], (1, 0, 2)).reshape(C, C)
    wv = jnp.transpose(params["wv"], (1, 0, 2)).reshape(C, C)
    w_qkv = jnp.concatenate([wq, wk, wv], axis=-1)                     # (C, 3C)

    # ---- 1) fused QKV projection: K-tiled bf16 matmul -> single lane-dense (B, T, 3C) slab ----
    qkv = _tiled_matmul(x.reshape(M, C), w_qkv, bias=None, out_dtype=jnp.bfloat16)
    qkv = qkv.reshape(B, T, 3 * C)

    # ---- 2) causal flash attention: grid (B, q tiles, kv tiles), kv innermost / "arbitrary" ----
    Tp = T if T <= 256 else _round_up(T, 128)
    if Tp != T:
        # Padded key columns sit above the causal diagonal of every real query row (inert);
        # padded query rows are sliced away below.
        qkv = jnp.pad(qkv, ((0, 0), (0, Tp - T), (0, 0)))
    ta = _pick_tile(Tp)            # tq == tkv (required by the clamped K/V index_map)
    nt = Tp // ta

    if C % 128 == 0:
        # Production path: Q/K/V tiles are blocks 0/1/2 along the last (lane) dim.
        blk_w, q_blk, k_blk, v_blk = C, 0, 1, 2
        q_off = k_off = v_off = 0
    else:
        # Small-C fallback: full 3C-wide block (lane dim must be 128-divisible or full extent);
        # Q/K/V live at static lane offsets inside the block.
        blk_w, q_blk, k_blk, v_blk = 3 * C, 0, 0, 0
        q_off, k_off, v_off = 0, C, 2 * C

    in_specs = [
        pl.BlockSpec((1, ta, blk_w), lambda b, qi, ki: (b, qi, q_blk)),
        # Clamp the kv block index at qi: skipped above-diagonal steps re-use the diagonal
        # block, so Pallas elides their K/V DMA (~2x less K/V HBM traffic for causal attention).
        pl.BlockSpec((1, ta, blk_w),
                     lambda b, qi, ki: (b, jnp.minimum(ki, qi), k_blk)),
        pl.BlockSpec((1, ta, blk_w),
                     lambda b, qi, ki: (b, jnp.minimum(ki, qi), v_blk)),
    ]
    inputs = [qkv, qkv, qkv]

    has_mask = attention_mask is not None
    if has_mask:
        mask = attention_mask
        if mask.ndim == 2:
            mask = mask[:, :, None]
        assert mask.shape == (B, T, 1), "attention_mask must be (B, T) or (B, T, 1)"
        mask = mask.astype(jnp.float32)
        if Tp != T:
            mask = jnp.pad(mask, ((0, 0), (0, Tp - T), (0, 0)))
        inputs.append(mask)
        in_specs.append(pl.BlockSpec((1, ta, 1), lambda b, qi, ki: (b, qi, 0)))

    attn = pl.pallas_call(
        functools.partial(_flash_attn_kernel, n_heads=n_heads, head_size=head_size,
                          tq=ta, q_off=q_off, k_off=k_off, v_off=v_off, has_mask=has_mask),
        out_shape=jax.ShapeDtypeStruct((B, Tp, C), jnp.bfloat16),
        grid_spec=pltpu.PrefetchScalarGridSpec(
            num_scalar_prefetch=0,
            grid=(B, nt, nt),
            in_specs=in_specs,
            out_specs=pl.BlockSpec((1, ta, C), lambda b, qi, ki: (b, qi, 0)),
            scratch_shapes=[
                pltpu.VMEM((n_heads, ta, 1), jnp.float32),            # running max m
                pltpu.VMEM((n_heads, ta, 1), jnp.float32),            # running sum l
                pltpu.VMEM((n_heads, ta, head_size), jnp.float32),    # output accumulator
            ],
        ),
        compiler_params=pltpu.CompilerParams(
            dimension_semantics=("parallel", "parallel", "arbitrary")),
    )(*inputs)
    if Tp != T:
        attn = attn[:, :T, :]

    # ---- 3) output projection: K-tiled bf16 matmul + f32 bias epilogue ----
    out = _tiled_matmul(attn.reshape(M, C), params["w_proj"],
                        bias=params["b_proj"], out_dtype=x.dtype)
    return out.reshape(B, T, C)


# ---------------------------------------------------------------------------------------
# Params + pure-JAX reference (mirrors the PyTorch module) for self-validation.
# ---------------------------------------------------------------------------------------
def init_params(key, embd_dim, n_heads, head_size):
    ks = jax.random.split(key, 5)
    s = 0.02
    wq = s * jax.random.normal(ks[0], (n_heads, embd_dim, head_size), jnp.float32)
    wk = s * jax.random.normal(ks[1], (n_heads, embd_dim, head_size), jnp.float32)
    wv = s * jax.random.normal(ks[2], (n_heads, embd_dim, head_size), jnp.float32)
    w_proj = s * jax.random.normal(ks[3], (embd_dim, embd_dim), jnp.float32)
    b_proj = s * jax.random.normal(ks[4], (embd_dim,), jnp.float32)
    return dict(wq=wq, wk=wk, wv=wv, w_proj=w_proj, b_proj=b_proj)


def _reference(x, params, attention_mask=None):
    B, T, C = x.shape
    n_heads, _, H = params["wq"].shape
    tril = jnp.tril(jnp.ones((T, T), dtype=bool))
    heads = []
    for h in range(n_heads):
        q = x @ params["wq"][h]
        k = x @ params["wk"][h]
        v = x @ params["wv"][h]
        w = jnp.einsum("btd,bsd->bts", q, k) * (H ** -0.5)
        w = jnp.where(tril[None], w, -jnp.inf)
        w = jax.nn.softmax(w, axis=-1)
        a = jnp.einsum("bts,bsd->btd", w, v)
        if attention_mask is not None:
            a = jnp.where(attention_mask == 0, 0.0, a)
        heads.append(a)
    cat = jnp.concatenate(heads, axis=-1)
    return cat @ params["w_proj"] + params["b_proj"]


if __name__ == "__main__":
    # Small config consistent with the module: T == window_size, n_heads*head_size == embd_dim.
    B, T, C = 2, 8, 32
    n_heads, head_size = 4, 8

    key = jax.random.PRNGKey(0)
    k_x, k_p, k_m = jax.random.split(key, 3)
    x = jax.random.normal(k_x, (B, T, C), jnp.float32)
    params = init_params(k_p, C, n_heads, head_size)

    # bf16 MXU operands + approx reciprocal -> compare against the f32 reference with a
    # correspondingly relaxed (but still tight for these magnitudes) tolerance.
    rtol, atol = 2e-2, 2e-3

    # No-mask path.
    out = jax.jit(multi_head_atten)(x, params)
    jax.block_until_ready(out)
    assert out.shape == (B, T, C)
    ref = _reference(x, params)
    assert jnp.allclose(out, ref, rtol=rtol, atol=atol), "mismatch vs reference (no mask)"

    # Padding-mask path (mask zeroes the attention output, as in the PyTorch module).
    mask = (jax.random.uniform(k_m, (B, T, 1)) > 0.3).astype(jnp.float32)
    out_m = jax.jit(multi_head_atten)(x, params, attention_mask=mask)
    jax.block_until_ready(out_m)
    ref_m = _reference(x, params, attention_mask=mask)
    assert jnp.allclose(out_m, ref_m, rtol=rtol, atol=atol), "mismatch vs reference (mask)"

    print("KERNEL_OK")
</pallas_src>

<mosaic_0001>
module attributes {stable_mosaic.version = 11 : i64} {
  func.func @_matmul_kernel(%arg0: i32, %arg1: i32, %arg2: i32, %arg3: memref<16x32xbf16, #tpu.memory_space<vmem>>, %arg4: memref<32x32xbf16, #tpu.memory_space<vmem>>, %arg5: memref<1x32xf32, #tpu.memory_space<vmem>>, %arg6: memref<16x32xf32, #tpu.memory_space<vmem>>, %arg7: memref<16x32xf32, #tpu.memory_space<vmem>>) attributes {dimension_semantics = [#tpu.dimension_semantics<parallel>, #tpu.dimension_semantics<parallel>, #tpu.dimension_semantics<arbitrary>], iteration_bounds = array<i64: 1, 1, 1>, scalar_prefetch = 0 : i64, scratch_operands = 1 : i64, tpu.core_type = #tpu.core_type<tc>, window_params = [{transform_indices = @transform_0, window_bounds = array<i64: 16, 32>}, {transform_indices = @transform_1, window_bounds = array<i64: 32, 32>}, {transform_indices = @transform_2, window_bounds = array<i64: 1, 32>}, {transform_indices = @transform_3, window_bounds = array<i64: 16, 32>}]} {
    %c0_i32 = arith.constant 0 : i32
    %0 = arith.cmpi eq, %arg2, %c0_i32 : i32
    %1 = arith.extui %0 : i1 to i32
    %c0_i32_0 = arith.constant 0 : i32
    %2 = arith.cmpi ne, %1, %c0_i32_0 : i32
    scf.if %2 {
      %cst_10 = arith.constant 0.000000e+00 : f32
      %12 = vector.broadcast %cst_10 : f32 to vector<16x32xf32>
      %c0_11 = arith.constant 0 : index
      %c0_12 = arith.constant 0 : index
      %13 = vector.load %arg7[%c0_11, %c0_12] : memref<16x32xf32, #tpu.memory_space<vmem>>, vector<16x32xf32>
      tpu.vector_store %arg7[%c0_11, %c0_12], %12 {strides = array<i32>} : memref<16x32xf32, #tpu.memory_space<vmem>>, vector<16x32xf32>,
    } else {
    }
    %c0 = arith.constant 0 : index
    %c0_1 = arith.constant 0 : index
    %3 = vector.load %arg7[%c0, %c0_1] : memref<16x32xf32, #tpu.memory_space<vmem>>, vector<16x32xf32>
    %c0_2 = arith.constant 0 : index
    %c0_3 = arith.constant 0 : index
    %4 = vector.load %arg3[%c0_2, %c0_3] : memref<16x32xbf16, #tpu.memory_space<vmem>>, vector<16x32xbf16>
    %c0_4 = arith.constant 0 : index
    %c0_5 = arith.constant 0 : index
    %5 = vector.load %arg4[%c0_4, %c0_5] : memref<32x32xbf16, #tpu.memory_space<vmem>>, vector<32x32xbf16>
    %cst = arith.constant dense<0.000000e+00> : vector<16x32xf32>
    %6 = tpu.matmul %4, %5, %cst {dimension_numbers = #tpu.dot_dimension_numbers<[1], [0], [0], [1], [0, 0, 1, 1], [], []>} : vector<16x32xbf16>, vector<32x32xbf16>, vector<16x32xf32> -> vector<16x32xf32>
    %7 = arith.addf %3, %6 : vector<16x32xf32>
    %c0_6 = arith.constant 0 : index
    %c0_7 = arith.constant 0 : index
    %8 = vector.load %arg7[%c0_6, %c0_7] : memref<16x32xf32, #tpu.memory_space<vmem>>, vector<16x32xf32>
    tpu.vector_store %arg7[%c0_6, %c0_7], %7 {strides = array<i32>} : memref<16x32xf32, #tpu.memory_space<vmem>>, vector<16x32xf32>,
    %c0_i32_8 = arith.constant 0 : i32
    %9 = arith.cmpi eq, %arg2, %c0_i32_8 : i32
    %10 = arith.extui %9 : i1 to i32
    %c0_i32_9 = arith.constant 0 : i32
    %11 = arith.cmpi ne, %10, %c0_i32_9 : i32
    scf.if %11 {
      %c0_10 = arith.constant 0 : index
      %c0_11 = arith.constant 0 : index
      %12 = vector.load %arg7[%c0_10, %c0_11] : memref<16x32xf32, #tpu.memory_space<vmem>>, vector<16x32xf32>
      %c0_12 = arith.constant 0 : index
      %c0_13 = arith.constant 0 : index
      %13 = vector.load %arg5[%c0_12, %c0_13] : memref<1x32xf32, #tpu.memory_space<vmem>>, vector<1x32xf32>
      %14 = vector.broadcast %13 : vector<1x32xf32> to vector<16x32xf32>
      %15 = arith.addf %12, %14 : vector<16x32xf32>
      %c0_14 = arith.constant 0 : index
      %c0_15 = arith.constant 0 : index
      %16 = vector.load %arg6[%c0_14, %c0_15] : memref<16x32xf32, #tpu.memory_space<vmem>>, vector<16x32xf32>
      tpu.vector_store %arg6[%c0_14, %c0_15], %15 {strides = array<i32>} : memref<16x32xf32, #tpu.memory_space<vmem>>, vector<16x32xf32>,
    } else {
    }
    return
  }
  func.func @transform_0(%arg0: i32, %arg1: i32, %arg2: i32) -> (i32, i32) {
    %c0_i32 = arith.constant 0 : i32
    return %arg0, %arg2 : i32, i32
  }
  func.func @transform_1(%arg0: i32, %arg1: i32, %arg2: i32) -> (i32, i32) {
    %c0_i32 = arith.constant 0 : i32
    return %arg2, %arg1 : i32, i32
  }
  func.func @transform_2(%arg0: i32, %arg1: i32, %arg2: i32) -> (i32, i32) {
    %c0_i32 = arith.constant 0 : i32
    %c0_i32_0 = arith.constant 0 : i32
    return %c0_i32, %arg1 : i32, i32
  }
  func.func @transform_3(%arg0: i32, %arg1: i32, %arg2: i32) -> (i32, i32) {
    %c0_i32 = arith.constant 0 : i32
    return %arg0, %arg1 : i32, i32
  }
}

module attributes {stable_mosaic.version = 11 : i64} {
  func.func @_matmul_kernel(%arg0: i32, %arg1: i32, %arg2: i32, %arg3: memref<16x32xbf16, #tpu.memory_space<vmem>>, %arg4: memref<32x96xbf16, #tpu.memory_space<vmem>>, %arg5: memref<16x96xbf16, #tpu.memory_space<vmem>>, %arg6: memref<16x96xf32, #tpu.memory_space<vmem>>) attributes {dimension_semantics = [#tpu.dimension_semantics<parallel>, #tpu.dimension_semantics<parallel>, #tpu.dimension_semantics<arbitrary>], iteration_bounds = array<i64: 1, 1, 1>, scalar_prefetch = 0 : i64, scratch_operands = 1 : i64, tpu.core_type = #tpu.core_type<tc>, window_params = [{transform_indices = @transform_0, window_bounds = array<i64: 16, 32>}, {transform_indices = @transform_1, window_bounds = array<i64: 32, 96>}, {transform_indices = @transform_2, window_bounds = array<i64: 16, 96>}]} {
    %c0_i32 = arith.constant 0 : i32
    %0 = arith.cmpi eq, %arg2, %c0_i32 : i32
    %1 = arith.extui %0 : i1 to i32
    %c0_i32_0 = arith.constant 0 : i32
    %2 = arith.cmpi ne, %1, %c0_i32_0 : i32
    scf.if %2 {
      %cst_10 = arith.constant 0.000000e+00 : f32
      %12 = vector.broadcast %cst_10 : f32 to vector<16x96xf32>
      %c0_11 = arith.constant 0 : index
      %c0_12 = arith.constant 0 : index
      %13 = vector.load %arg6[%c0_11, %c0_12] : memref<16x96xf32, #tpu.memory_space<vmem>>, vector<16x96xf32>
      tpu.vector_store %arg6[%c0_11, %c0_12], %12 {strides = array<i32>} : memref<16x96xf32, #tpu.memory_space<vmem>>, vector<16x96xf32>,
    } else {
    }
    %c0 = arith.constant 0 : index
    %c0_1 = arith.constant 0 : index
    %3 = vector.load %arg6[%c0, %c0_1] : memref<16x96xf32, #tpu.memory_space<vmem>>, vector<16x96xf32>
    %c0_2 = arith.constant 0 : index
    %c0_3 = arith.constant 0 : index
    %4 = vector.load %arg3[%c0_2, %c0_3] : memref<16x32xbf16, #tpu.memory_space<vmem>>, vector<16x32xbf16>
    %c0_4 = arith.constant 0 : index
    %c0_5 = arith.constant 0 : index
    %5 = vector.load %arg4[%c0_4, %c0_5] : memref<32x96xbf16, #tpu.memory_space<vmem>>, vector<32x96xbf16>
    %cst = arith.constant dense<0.000000e+00> : vector<16x96xf32>
    %6 = tpu.matmul %4, %5, %cst {dimension_numbers = #tpu.dot_dimension_numbers<[1], [0], [0], [1], [0, 0, 1, 1], [], []>} : vector<16x32xbf16>, vector<32x96xbf16>, vector<16x96xf32> -> vector<16x96xf32>
    %7 = arith.addf %3, %6 : vector<16x96xf32>
    %c0_6 = arith.constant 0 : index
    %c0_7 = arith.constant 0 : index
    %8 = vector.load %arg6[%c0_6, %c0_7] : memref<16x96xf32, #tpu.memory_space<vmem>>, vector<16x96xf32>
    tpu.vector_store %arg6[%c0_6, %c0_7], %7 {strides = array<i32>} : memref<16x96xf32, #tpu.memory_space<vmem>>, vector<16x96xf32>,
    %c0_i32_8 = arith.constant 0 : i32
    %9 = arith.cmpi eq, %arg2, %c0_i32_8 : i32
    %10 = arith.extui %9 : i1 to i32
    %c0_i32_9 = arith.constant 0 : i32
    %11 = arith.cmpi ne, %10, %c0_i32_9 : i32
    scf.if %11 {
      %c0_10 = arith.constant 0 : index
      %c0_11 = arith.constant 0 : index
      %12 = vector.load %arg6[%c0_10, %c0_11] : memref<16x96xf32, #tpu.memory_space<vmem>>, vector<16x96xf32>
      %13 = arith.truncf %12 : vector<16x96xf32> to vector<16x96xbf16>
      %c0_12 = arith.constant 0 : index
      %c0_13 = arith.constant 0 : index
      %14 = vector.load %arg5[%c0_12, %c0_13] : memref<16x96xbf16, #tpu.memory_space<vmem>>, vector<16x96xbf16>
      tpu.vector_store %arg5[%c0_12, %c0_13], %13 {strides = array<i32>} : memref<16x96xbf16, #tpu.memory_space<vmem>>, vector<16x96xbf16>,
    } else {
    }
    return
  }
  func.func @transform_0(%arg0: i32, %arg1: i32, %arg2: i32) -> (i32, i32) {
    %c0_i32 = arith.constant 0 : i32
    return %arg0, %arg2 : i32, i32
  }
  func.func @transform_1(%arg0: i32, %arg1: i32, %arg2: i32) -> (i32, i32) {
    %c0_i32 = arith.constant 0 : i32
    return %arg2, %arg1 : i32, i32
  }
  func.func @transform_2(%arg0: i32, %arg1: i32, %arg2: i32) -> (i32, i32) {
    %c0_i32 = arith.constant 0 : i32
    return %arg0, %arg1 : i32, i32
  }
}

module attributes {stable_mosaic.version = 11 : i64} {
  func.func @_flash_attn_kernel(%arg0: i32, %arg1: i32, %arg2: i32, %arg3: memref<1x8x96xbf16, #tpu.memory_space<vmem>>, %arg4: memref<1x8x96xbf16, #tpu.memory_space<vmem>>, %arg5: memref<1x8x96xbf16, #tpu.memory_space<vmem>>, %arg6: memref<1x8x32xbf16, #tpu.memory_space<vmem>>, %arg7: memref<4x8x1xf32, #tpu.memory_space<vmem>>, %arg8: memref<4x8x1xf32, #tpu.memory_space<vmem>>, %arg9: memref<4x8x8xf32, #tpu.memory_space<vmem>>) attributes {dimension_semantics = [#tpu.dimension_semantics<parallel>, #tpu.dimension_semantics<parallel>, #tpu.dimension_semantics<arbitrary>], iteration_bounds = array<i64: 2, 1, 1>, scalar_prefetch = 0 : i64, scratch_operands = 3 : i64, tpu.core_type = #tpu.core_type<tc>, window_params = [{transform_indices = @transform_0, window_bounds = array<i64: 1, 8, 96>}, {transform_indices = @transform_1, window_bounds = array<i64: 1, 8, 96>}, {transform_indices = @transform_2, window_bounds = array<i64: 1, 8, 96>}, {transform_indices = @transform_3, window_bounds = array<i64: 1, 8, 32>}]} {
    %c0_i32 = arith.constant 0 : i32
    %0 = arith.cmpi eq, %arg2, %c0_i32 : i32
    %1 = arith.extui %0 : i1 to i32
    %c0_i32_0 = arith.constant 0 : i32
    %2 = arith.cmpi ne, %1, %c0_i32_0 : i32
    scf.if %2 {
      %cst = arith.constant -1.000000e+30 : f32
      %9 = vector.broadcast %cst : f32 to vector<4x8x1xf32>
      %c0 = arith.constant 0 : index
      %c0_4 = arith.constant 0 : index
      %c0_5 = arith.constant 0 : index
      %10 = vector.load %arg7[%c0, %c0_4, %c0_5] : memref<4x8x1xf32, #tpu.memory_space<vmem>>, vector<4x8x1xf32>
      tpu.vector_store %arg7[%c0, %c0_4, %c0_5], %9 {strides = array<i32>} : memref<4x8x1xf32, #tpu.memory_space<vmem>>, vector<4x8x1xf32>,
      %cst_6 = arith.constant 0.000000e+00 : f32
      %11 = vector.broadcast %cst_6 : f32 to vector<4x8x1xf32>
      %c0_7 = arith.constant 0 : index
      %c0_8 = arith.constant 0 : index
      %c0_9 = arith.constant 0 : index
      %12 = vector.load %arg8[%c0_7, %c0_8, %c0_9] : memref<4x8x1xf32, #tpu.memory_space<vmem>>, vector<4x8x1xf32>
      tpu.vector_store %arg8[%c0_7, %c0_8, %c0_9], %11 {strides = array<i32>} : memref<4x8x1xf32, #tpu.memory_space<vmem>>, vector<4x8x1xf32>,
      %cst_10 = arith.constant 0.000000e+00 : f32
      %13 = vector.broadcast %cst_10 : f32 to vector<4x8x8xf32>
      %c0_11 = arith.constant 0 : index
      %c0_12 = arith.constant 0 : index
      %c0_13 = arith.constant 0 : index
      %14 = vector.load %arg9[%c0_11, %c0_12, %c0_13] : memref<4x8x8xf32, #tpu.memory_space<vmem>>, vector<4x8x8xf32>
      tpu.vector_store %arg9[%c0_11, %c0_12, %c0_13], %13 {strides = array<i32>} : memref<4x8x8xf32, #tpu.memory_space<vmem>>, vector<4x8x8xf32>,
    } else {
    }
    %3 = arith.cmpi sle, %arg2, %arg1 : i32
    %4 = arith.extui %3 : i1 to i32
    %c0_i32_1 = arith.constant 0 : i32
    %5 = arith.cmpi ne, %4, %c0_i32_1 : i32
    scf.if %5 {
      %c0 = arith.constant 0 : index
      %c0_4 = arith.constant 0 : index
      %c0_5 = arith.constant 0 : index
      %9 = vector.load %arg3[%c0, %c0_4, %c0_5] : memref<1x8x96xbf16, #tpu.memory_space<vmem>>, vector<1x8x96xbf16>
      %10 = vector.shape_cast %9 : vector<1x8x96xbf16> to vector<8x96xbf16>
      %c0_6 = arith.constant 0 : index
      %c0_7 = arith.constant 0 : index
      %c0_8 = arith.constant 0 : index
      %11 = vector.load %arg4[%c0_6, %c0_7, %c0_8] : memref<1x8x96xbf16, #tpu.memory_space<vmem>>, vector<1x8x96xbf16>
      %12 = vector.shape_cast %11 : vector<1x8x96xbf16> to vector<8x96xbf16>
      %c0_9 = arith.constant 0 : index
      %c0_10 = arith.constant 0 : index
      %c0_11 = arith.constant 0 : index
      %13 = vector.load %arg5[%c0_9, %c0_10, %c0_11] : memref<1x8x96xbf16, #tpu.memory_space<vmem>>, vector<1x8x96xbf16>
      %14 = vector.shape_cast %13 : vector<1x8x96xbf16> to vector<8x96xbf16>
      %c8_i32 = arith.constant 8 : i32
      %15 = arith.muli %arg1, %c8_i32 : i32
      %16 = tpu.iota {dimensions = array<i32: 0>} : vector<8x8xi32>
      %17 = vector.broadcast %15 : i32 to vector<8x8xi32>
      %18 = arith.addi %17, %16 : vector<8x8xi32>
      %c8_i32_12 = arith.constant 8 : i32
      %19 = arith.muli %arg2, %c8_i32_12 : i32
      %20 = tpu.iota {dimensions = array<i32: 1>} : vector<8x8xi32>
      %21 = vector.broadcast %19 : i32 to vector<8x8xi32>
      %22 = arith.addi %21, %20 : vector<8x8xi32>
      %23 = arith.cmpi sle, %22, %18 : vector<8x8xi32>
      %24 = vector.extract_strided_slice %10 {offsets = [0, 0], sizes = [8, 8], strides = [1, 1]} : vector<8x96xbf16> to vector<8x8xbf16>
      %25 = vector.extract_strided_slice %12 {offsets = [0, 32], sizes = [8, 8], strides = [1, 1]} : vector<8x96xbf16> to vector<8x8xbf16>
      %26 = vector.extract_strided_slice %14 {offsets = [0, 64], sizes = [8, 8], strides = [1, 1]} : vector<8x96xbf16> to vector<8x8xbf16>
      %cst = arith.constant dense<0.000000e+00> : vector<8x8xf32>
      %27 = tpu.matmul %24, %25, %cst {dimension_numbers = #tpu.dot_dimension_numbers<[1], [1], [0], [0], [0, 0, 1, 0], [], []>} : vector<8x8xbf16>, vector<8x8xbf16>, vector<8x8xf32> -> vector<8x8xf32>
      %cst_13 = arith.constant -1.000000e+30 : f32
      %28 = vector.broadcast %cst_13 : f32 to vector<8x8xf32>
      %29 = arith.select %23, %27, %28 : vector<8x8xi1>, vector<8x8xf32>
      %c0_14 = arith.constant 0 : index
      %c0_15 = arith.constant 0 : index
      %c0_16 = arith.constant 0 : index
      %30 = vector.load %arg7[%c0_14, %c0_15, %c0_16] : memref<4x8x1xf32, #tpu.memory_space<vmem>>, vector<1x8x1xf32>
      %31 = vector.shape_cast %30 : vector<1x8x1xf32> to vector<8x1xf32>
      %cst_17 = arith.constant dense<0xFF800000> : vector<8xf32>
      %32 = vector.multi_reduction <maximumf>, %29, %cst_17 [1] : vector<8x8xf32> to vector<8xf32>
      %33 = vector.shape_cast %32 : vector<8xf32> to vector<8x1xf32>
      %34 = arith.maximumf %31, %33 : vector<8x1xf32>
      %35 = arith.subf %31, %34 : vector<8x1xf32>
      %36 = math.exp %35 : vector<8x1xf32>
      %37 = vector.broadcast %34 : vector<8x1xf32> to vector<8x8xf32>
      %38 = arith.subf %29, %37 : vector<8x8xf32>
      %39 = math.exp %38 : vector<8x8xf32>
      %c0_18 = arith.constant 0 : index
      %c0_19 = arith.constant 0 : index
      %c0_20 = arith.constant 0 : index
      %40 = vector.load %arg8[%c0_18, %c0_19, %c0_20] : memref<4x8x1xf32, #tpu.memory_space<vmem>>, vector<1x8x1xf32>
      %41 = vector.shape_cast %40 : vector<1x8x1xf32> to vector<8x1xf32>
      %42 = arith.mulf %36, %41 : vector<8x1xf32>
      %cst_21 = arith.constant dense<0.000000e+00> : vector<8xf32>
      %43 = vector.multi_reduction <add>, %39, %cst_21 [1] : vector<8x8xf32> to vector<8xf32>
      %44 = vector.shape_cast %43 : vector<8xf32> to vector<8x1xf32>
      %45 = arith.addf %42, %44 : vector<8x1xf32>
      %c0_22 = arith.constant 0 : index
      %c0_23 = arith.constant 0 : index
      %c0_24 = arith.constant 0 : index
      %46 = vector.load %arg8[%c0_22, %c0_23, %c0_24] : memref<4x8x1xf32, #tpu.memory_space<vmem>>, vector<1x8x1xf32>
      %47 = vector.shape_cast %46 : vector<1x8x1xf32> to vector<8x1xf32>
      %48 = vector.shape_cast %45 : vector<8x1xf32> to vector<1x8x1xf32>
      tpu.vector_store %arg8[%c0_22, %c0_23, %c0_24], %48 {strides = array<i32>} : memref<4x8x1xf32, #tpu.memory_space<vmem>>, vector<1x8x1xf32>,
      %c0_25 = arith.constant 0 : index
      %c0_26 = arith.constant 0 : index
      %c0_27 = arith.constant 0 : index
      %49 = vector.load %arg9[%c0_25, %c0_26, %c0_27] : memref<4x8x8xf32, #tpu.memory_space<vmem>>, vector<1x8x8xf32>
      %50 = vector.shape_cast %49 : vector<1x8x8xf32> to vector<8x8xf32>
      %51 = vector.broadcast %36 : vector<8x1xf32> to vector<8x8xf32>
      %52 = arith.mulf %51, %50 : vector<8x8xf32>
      %53 = arith.truncf %39 : vector<8x8xf32> to vector<8x8xbf16>
      %cst_28 = arith.constant dense<0.000000e+00> : vector<8x8xf32>
      %54 = tpu.matmul %53, %26, %cst_28 {dimension_numbers = #tpu.dot_dimension_numbers<[1], [0], [0], [1], [0, 0, 1, 1], [], []>} : vector<8x8xbf16>, vector<8x8xbf16>, vector<8x8xf32> -> vector<8x8xf32>
      %55 = arith.addf %52, %54 : vector<8x8xf32>
      %c0_29 = arith.constant 0 : index
      %c0_30 = arith.constant 0 : index
      %c0_31 = arith.constant 0 : index
      %56 = vector.load %arg9[%c0_29, %c0_30, %c0_31] : memref<4x8x8xf32, #tpu.memory_space<vmem>>, vector<1x8x8xf32>
      %57 = vector.shape_cast %56 : vector<1x8x8xf32> to vector<8x8xf32>
      %58 = vector.shape_cast %55 : vector<8x8xf32> to vector<1x8x8xf32>
      tpu.vector_store %arg9[%c0_29, %c0_30, %c0_31], %58 {strides = array<i32>} : memref<4x8x8xf32, #tpu.memory_space<vmem>>, vector<1x8x8xf32>,
      %c0_32 = arith.constant 0 : index
      %c0_33 = arith.constant 0 : index
      %c0_34 = arith.constant 0 : index
      %59 = vector.load %arg7[%c0_32, %c0_33, %c0_34] : memref<4x8x1xf32, #tpu.memory_space<vmem>>, vector<1x8x1xf32>
      %60 = vector.shape_cast %59 : vector<1x8x1xf32> to vector<8x1xf32>
      %61 = vector.shape_cast %34 : vector<8x1xf32> to vector<1x8x1xf32>
      tpu.vector_store %arg7[%c0_32, %c0_33, %c0_34], %61 {strides = array<i32>} : memref<4x8x1xf32, #tpu.memory_space<vmem>>, vector<1x8x1xf32>,
      %62 = vector.extract_strided_slice %10 {offsets = [0, 8], sizes = [8, 8], strides = [1, 1]} : vector<8x96xbf16> to vector<8x8xbf16>
      %63 = vector.extract_strided_slice %12 {offsets = [0, 40], sizes = [8, 8], strides = [1, 1]} : vector<8x96xbf16> to vector<8x8xbf16>
      %64 = vector.extract_strided_slice %14 {offsets = [0, 72], sizes = [8, 8], strides = [1, 1]} : vector<8x96xbf16> to vector<8x8xbf16>
      %cst_35 = arith.constant dense<0.000000e+00> : vector<8x8xf32>
      %65 = tpu.matmul %62, %63, %cst_35 {dimension_numbers = #tpu.dot_dimension_numbers<[1], [1], [0], [0], [0, 0, 1, 0], [], []>} : vector<8x8xbf16>, vector<8x8xbf16>, vector<8x8xf32> -> vector<8x8xf32>
      %cst_36 = arith.constant -1.000000e+30 : f32
      %66 = vector.broadcast %cst_36 : f32 to vector<8x8xf32>
      %67 = arith.select %23, %65, %66 : vector<8x8xi1>, vector<8x8xf32>
      %c1 = arith.constant 1 : index
      %c0_37 = arith.constant 0 : index
      %c0_38 = arith.constant 0 : index
      %68 = vector.load %arg7[%c1, %c0_37, %c0_38] : memref<4x8x1xf32, #tpu.memory_space<vmem>>, vector<1x8x1xf32>
      %69 = vector.shape_cast %68 : vector<1x8x1xf32> to vector<8x1xf32>
      %cst_39 = arith.constant dense<0xFF800000> : vector<8xf32>
      %70 = vector.multi_reduction <maximumf>, %67, %cst_39 [1] : vector<8x8xf32> to vector<8xf32>
      %71 = vector.shape_cast %70 : vector<8xf32> to vector<8x1xf32>
      %72 = arith.maximumf %69, %71 : vector<8x1xf32>
      %73 = arith.subf %69, %72 : vector<8x1xf32>
      %74 = math.exp %73 : vector<8x1xf32>
      %75 = vector.broadcast %72 : vector<8x1xf32> to vector<8x8xf32>
      %76 = arith.subf %67, %75 : vector<8x8xf32>
      %77 = math.exp %76 : vector<8x8xf32>
      %c1_40 = arith.constant 1 : index
      %c0_41 = arith.constant 0 : index
      %c0_42 = arith.constant 0 : index
      %78 = vector.load %arg8[%c1_40, %c0_41, %c0_42] : memref<4x8x1xf32, #tpu.memory_space<vmem>>, vector<1x8x1xf32>
      %79 = vector.shape_cast %78 : vector<1x8x1xf32> to vector<8x1xf32>
      %80 = arith.mulf %74, %79 : vector<8x1xf32>
      %cst_43 = arith.constant dense<0.000000e+00> : vector<8xf32>
      %81 = vector.multi_reduction <add>, %77, %cst_43 [1] : vector<8x8xf32> to vector<8xf32>
      %82 = vector.shape_cast %81 : vector<8xf32> to vector<8x1xf32>
      %83 = arith.addf %80, %82 : vector<8x1xf32>
      %c1_44 = arith.constant 1 : index
      %c0_45 = arith.constant 0 : index
      %c0_46 = arith.constant 0 : index
      %84 = vector.load %arg8[%c1_44, %c0_45, %c0_46] : memref<4x8x1xf32, #tpu.memory_space<vmem>>, vector<1x8x1xf32>
      %85 = vector.shape_cast %84 : vector<1x8x1xf32> to vector<8x1xf32>
      %86 = vector.shape_cast %83 : vector<8x1xf32> to vector<1x8x1xf32>
      tpu.vector_store %arg8[%c1_44, %c0_45, %c0_46], %86 {strides = array<i32>} : memref<4x8x1xf32, #tpu.memory_space<vmem>>, vector<1x8x1xf32>,
      %c1_47 = arith.constant 1 : index
      %c0_48 = arith.constant 0 : index
      %c0_49 = arith.constant 0 : index
      %87 = vector.load %arg9[%c1_47, %c0_48, %c0_49] : memref<4x8x8xf32, #tpu.memory_space<vmem>>, vector<1x8x8xf32>
      %88 = vector.shape_cast %87 : vector<1x8x8xf32> to vector<8x8xf32>
      %89 = vector.broadcast %74 : vector<8x1xf32> to vector<8x8xf32>
      %90 = arith.mulf %89, %88 : vector<8x8xf32>
      %91 = arith.truncf %77 : vector<8x8xf32> to vector<8x8xbf16>
      %cst_50 = arith.constant dense<0.000000e+00> : vector<8x8xf32>
      %92 = tpu.matmul %91, %64, %cst_50 {dimension_numbers = #tpu.dot_dimension_numbers<[1], [0], [0], [1], [0, 0, 1, 1], [], []>} : vector<8x8xbf16>, vector<8x8xbf16>, vector<8x8xf32> -> vector<8x8xf32>
      %93 = arith.addf %90, %92 : vector<8x8xf32>
      %c1_51 = arith.constant 1 : index
      %c0_52 = arith.constant 0 : index
      %c0_53 = arith.constant 0 : index
      %94 = vector.load %arg9[%c1_51, %c0_52, %c0_53] : memref<4x8x8xf32, #tpu.memory_space<vmem>>, vector<1x8x8xf32>
      %95 = vector.shape_cast %94 : vector<1x8x8xf32> to vector<8x8xf32>
      %96 = vector.shape_cast %93 : vector<8x8xf32> to vector<1x8x8xf32>
      tpu.vector_store %arg9[%c1_51, %c0_52, %c0_53], %96 {strides = array<i32>} : memref<4x8x8xf32, #tpu.memory_space<vmem>>, vector<1x8x8xf32>,
      %c1_54 = arith.constant 1 : index
      %c0_55 = arith.constant 0 : index
      %c0_56 = arith.constant 0 : index
      %97 = vector.load %arg7[%c1_54, %c0_55, %c0_56] : memref<4x8x1xf32, #tpu.memory_space<vmem>>, vector<1x8x1xf32>
      %98 = vector.shape_cast %97 : vector<1x8x1xf32> to vector<8x1xf32>
      %99 = vector.shape_cast %72 : vector<8x1xf32> to vector<1x8x1xf32>
      tpu.vector_store %arg7[%c1_54, %c0_55, %c0_56], %99 {strides = array<i32>} : memref<4x8x1xf32, #tpu.memory_space<vmem>>, vector<1x8x1xf32>,
      %100 = vector.extract_strided_slice %10 {offsets = [0, 16], sizes = [8, 8], strides = [1, 1]} : vector<8x96xbf16> to vector<8x8xbf16>
      %101 = vector.extract_strided_slice %12 {offsets = [0, 48], sizes = [8, 8], strides = [1, 1]} : vector<8x96xbf16> to vector<8x8xbf16>
      %102 = vector.extract_strided_slice %14 {offsets = [0, 80], sizes = [8, 8], strides = [1, 1]} : vector<8x96xbf16> to vector<8x8xbf16>
      %cst_57 = arith.constant dense<0.000000e+00> : vector<8x8xf32>
      %103 = tpu.matmul %100, %101, %cst_57 {dimension_numbers = #tpu.dot_dimension_numbers<[1], [1], [0], [0], [0, 0, 1, 0], [], []>} : vector<8x8xbf16>, vector<8x8xbf16>, vector<8x8xf32> -> vector<8x8xf32>
      %cst_58 = arith.constant -1.000000e+30 : f32
      %104 = vector.broadcast %cst_58 : f32 to vector<8x8xf32>
      %105 = arith.select %23, %103, %104 : vector<8x8xi1>, vector<8x8xf32>
      %c2 = arith.constant 2 : index
      %c0_59 = arith.constant 0 : index
      %c0_60 = arith.constant 0 : index
      %106 = vector.load %arg7[%c2, %c0_59, %c0_60] : memref<4x8x1xf32, #tpu.memory_space<vmem>>, vector<1x8x1xf32>
      %107 = vector.shape_cast %106 : vector<1x8x1xf32> to vector<8x1xf32>
      %cst_61 = arith.constant dense<0xFF800000> : vector<8xf32>
      %108 = vector.multi_reduction <maximumf>, %105, %cst_61 [1] : vector<8x8xf32> to vector<8xf32>
      %109 = vector.shape_cast %108 : vector<8xf32> to vector<8x1xf32>
      %110 = arith.maximumf %107, %109 : vector<8x1xf32>
      %111 = arith.subf %107, %110 : vector<8x1xf32>
      %112 = math.exp %111 : vector<8x1xf32>
      %113 = vector.broadcast %110 : vector<8x1xf32> to vector<8x8xf32>
      %114 = arith.subf %105, %113 : vector<8x8xf32>
      %115 = math.exp %114 : vector<8x8xf32>
      %c2_62 = arith.constant 2 : index
      %c0_63 = arith.constant 0 : index
      %c0_64 = arith.constant 0 : index
      %116 = vector.load %arg8[%c2_62, %c0_63, %c0_64] : memref<4x8x1xf32, #tpu.memory_space<vmem>>, vector<1x8x1xf32>
      %117 = vector.shape_cast %116 : vector<1x8x1xf32> to vector<8x1xf32>
      %118 = arith.mulf %112, %117 : vector<8x1xf32>
      %cst_65 = arith.constant dense<0.000000e+00> : vector<8xf32>
      %119 = vector.multi_reduction <add>, %115, %cst_65 [1] : vector<8x8xf32> to vector<8xf32>
      %120 = vector.shape_cast %119 : vector<8xf32> to vector<8x1xf32>
      %121 = arith.addf %118, %120 : vector<8x1xf32>
      %c2_66 = arith.constant 2 : index
      %c0_67 = arith.constant 0 : index
      %c0_68 = arith.constant 0 : index
      %122 = vector.load %arg8[%c2_66, %c0_67, %c0_68] : memref<4x8x1xf32, #tpu.memory_space<vmem>>, vector<1x8x1xf32>
      %123 = vector.shape_cast %122 : vector<1x8x1xf32> to vector<8x1xf32>
      %124 = vector.shape_cast %121 : vector<8x1xf32> to vector<1x8x1xf32>
      tpu.vector_store %arg8[%c2_66, %c0_67, %c0_68], %124 {strides = array<i32>} : memref<4x8x1xf32, #tpu.memory_space<vmem>>, vector<1x8x1xf32>,
      %c2_69 = arith.constant 2 : index
      %c0_70 = arith.constant 0 : index
      %c0_71 = arith.constant 0 : index
      %125 = vector.load %arg9[%c2_69, %c0_70, %c0_71] : memref<4x8x8xf32, #tpu.memory_space<vmem>>, vector<1x8x8xf32>
      %126 = vector.shape_cast %125 : vector<1x8x8xf32> to vector<8x8xf32>
      %127 = vector.broadcast %112 : vector<8x1xf32> to vector<8x8xf32>
      %128 = arith.mulf %127, %126 : vector<8x8xf32>
      %129 = arith.truncf %115 : vector<8x8xf32> to vector<8x8xbf16>
      %cst_72 = arith.constant dense<0.000000e+00> : vector<8x8xf32>
      %130 = tpu.matmul %129, %102, %cst_72 {dimension_numbers = #tpu.dot_dimension_numbers<[1], [0], [0], [1], [0, 0, 1, 1], [], []>} : vector<8x8xbf16>, vector<8x8xbf16>, vector<8x8xf32> -> vector<8x8xf32>
      %131 = arith.addf %128, %130 : vector<8x8xf32>
      %c2_73 = arith.constant 2 : index
      %c0_74 = arith.constant 0 : index
      %c0_75 = arith.constant 0 : index
      %132 = vector.load %arg9[%c2_73, %c0_74, %c0_75] : memref<4x8x8xf32, #tpu.memory_space<vmem>>, vector<1x8x8xf32>
      %133 = vector.shape_cast %132 : vector<1x8x8xf32> to vector<8x8xf32>
      %134 = vector.shape_cast %131 : vector<8x8xf32> to vector<1x8x8xf32>
      tpu.vector_store %arg9[%c2_73, %c0_74, %c0_75], %134 {strides = array<i32>} : memref<4x8x8xf32, #tpu.memory_space<vmem>>, vector<1x8x8xf32>,
      %c2_76 = arith.constant 2 : index
      %c0_77 = arith.constant 0 : index
      %c0_78 = arith.constant 0 : index
      %135 = vector.load %arg7[%c2_76, %c0_77, %c0_78] : memref<4x8x1xf32, #tpu.memory_space<vmem>>, vector<1x8x1xf32>
      %136 = vector.shape_cast %135 : vector<1x8x1xf32> to vector<8x1xf32>
      %137 = vector.shape_cast %110 : vector<8x1xf32> to vector<1x8x1xf32>
      tpu.vector_store %arg7[%c2_76, %c0_77, %c0_78], %137 {strides = array<i32>} : memref<4x8x1xf32, #tpu.memory_space<vmem>>, vector<1x8x1xf32>,
      %138 = vector.extract_strided_slice %10 {offsets = [0, 24], sizes = [8, 8], strides = [1, 1]} : vector<8x96xbf16> to vector<8x8xbf16>
      %139 = vector.extract_strided_slice %12 {offsets = [0, 56], sizes = [8, 8], strides = [1, 1]} : vector<8x96xbf16> to vector<8x8xbf16>
      %140 = vector.extract_strided_slice %14 {offsets = [0, 88], sizes = [8, 8], strides = [1, 1]} : vector<8x96xbf16> to vector<8x8xbf16>
      %cst_79 = arith.constant dense<0.000000e+00> : vector<8x8xf32>
      %141 = tpu.matmul %138, %139, %cst_79 {dimension_numbers = #tpu.dot_dimension_numbers<[1], [1], [0], [0], [0, 0, 1, 0], [], []>} : vector<8x8xbf16>, vector<8x8xbf16>, vector<8x8xf32> -> vector<8x8xf32>
      %cst_80 = arith.constant -1.000000e+30 : f32
      %142 = vector.broadcast %cst_80 : f32 to vector<8x8xf32>
      %143 = arith.select %23, %141, %142 : vector<8x8xi1>, vector<8x8xf32>
      %c3 = arith.constant 3 : index
      %c0_81 = arith.constant 0 : index
      %c0_82 = arith.constant 0 : index
      %144 = vector.load %arg7[%c3, %c0_81, %c0_82] : memref<4x8x1xf32, #tpu.memory_space<vmem>>, vector<1x8x1xf32>
      %145 = vector.shape_cast %144 : vector<1x8x1xf32> to vector<8x1xf32>
      %cst_83 = arith.constant dense<0xFF800000> : vector<8xf32>
      %146 = vector.multi_reduction <maximumf>, %143, %cst_83 [1] : vector<8x8xf32> to vector<8xf32>
      %147 = vector.shape_cast %146 : vector<8xf32> to vector<8x1xf32>
      %148 = arith.maximumf %145, %147 : vector<8x1xf32>
      %149 = arith.subf %145, %148 : vector<8x1xf32>
      %150 = math.exp %149 : vector<8x1xf32>
      %151 = vector.broadcast %148 : vector<8x1xf32> to vector<8x8xf32>
      %152 = arith.subf %143, %151 : vector<8x8xf32>
      %153 = math.exp %152 : vector<8x8xf32>
      %c3_84 = arith.constant 3 : index
      %c0_85 = arith.constant 0 : index
      %c0_86 = arith.constant 0 : index
      %154 = vector.load %arg8[%c3_84, %c0_85, %c0_86] : memref<4x8x1xf32, #tpu.memory_space<vmem>>, vector<1x8x1xf32>
      %155 = vector.shape_cast %154 : vector<1x8x1xf32> to vector<8x1xf32>
      %156 = arith.mulf %150, %155 : vector<8x1xf32>
      %cst_87 = arith.constant dense<0.000000e+00> : vector<8xf32>
      %157 = vector.multi_reduction <add>, %153, %cst_87 [1] : vector<8x8xf32> to vector<8xf32>
      %158 = vector.shape_cast %157 : vector<8xf32> to vector<8x1xf32>
      %159 = arith.addf %156, %158 : vector<8x1xf32>
      %c3_88 = arith.constant 3 : index
      %c0_89 = arith.constant 0 : index
      %c0_90 = arith.constant 0 : index
      %160 = vector.load %arg8[%c3_88, %c0_89, %c0_90] : memref<4x8x1xf32, #tpu.memory_space<vmem>>, vector<1x8x1xf32>
      %161 = vector.shape_cast %160 : vector<1x8x1xf32> to vector<8x1xf32>
      %162 = vector.shape_cast %159 : vector<8x1xf32> to vector<1x8x1xf32>
      tpu.vector_store %arg8[%c3_88, %c0_89, %c0_90], %162 {strides = array<i32>} : memref<4x8x1xf32, #tpu.memory_space<vmem>>, vector<1x8x1xf32>,
      %c3_91 = arith.constant 3 : index
      %c0_92 = arith.constant 0 : index
      %c0_93 = arith.constant 0 : index
      %163 = vector.load %arg9[%c3_91, %c0_92, %c0_93] : memref<4x8x8xf32, #tpu.memory_space<vmem>>, vector<1x8x8xf32>
      %164 = vector.shape_cast %163 : vector<1x8x8xf32> to vector<8x8xf32>
      %165 = vector.broadcast %150 : vector<8x1xf32> to vector<8x8xf32>
      %166 = arith.mulf %165, %164 : vector<8x8xf32>
      %167 = arith.truncf %153 : vector<8x8xf32> to vector<8x8xbf16>
      %cst_94 = arith.constant dense<0.000000e+00> : vector<8x8xf32>
      %168 = tpu.matmul %167, %140, %cst_94 {dimension_numbers = #tpu.dot_dimension_numbers<[1], [0], [0], [1], [0, 0, 1, 1], [], []>} : vector<8x8xbf16>, vector<8x8xbf16>, vector<8x8xf32> -> vector<8x8xf32>
      %169 = arith.addf %166, %168 : vector<8x8xf32>
      %c3_95 = arith.constant 3 : index
      %c0_96 = arith.constant 0 : index
      %c0_97 = arith.constant 0 : index
      %170 = vector.load %arg9[%c3_95, %c0_96, %c0_97] : memref<4x8x8xf32, #tpu.memory_space<vmem>>, vector<1x8x8xf32>
      %171 = vector.shape_cast %170 : vector<1x8x8xf32> to vector<8x8xf32>
      %172 = vector.shape_cast %169 : vector<8x8xf32> to vector<1x8x8xf32>
      tpu.vector_store %arg9[%c3_95, %c0_96, %c0_97], %172 {strides = array<i32>} : memref<4x8x8xf32, #tpu.memory_space<vmem>>, vector<1x8x8xf32>,
      %c3_98 = arith.constant 3 : index
      %c0_99 = arith.constant 0 : index
      %c0_100 = arith.constant 0 : index
      %173 = vector.load %arg7[%c3_98, %c0_99, %c0_100] : memref<4x8x1xf32, #tpu.memory_space<vmem>>, vector<1x8x1xf32>
      %174 = vector.shape_cast %173 : vector<1x8x1xf32> to vector<8x1xf32>
      %175 = vector.shape_cast %148 : vector<8x1xf32> to vector<1x8x1xf32>
      tpu.vector_store %arg7[%c3_98, %c0_99, %c0_100], %175 {strides = array<i32>} : memref<4x8x1xf32, #tpu.memory_space<vmem>>, vector<1x8x1xf32>,
    } else {
    }
    %c0_i32_2 = arith.constant 0 : i32
    %6 = arith.cmpi eq, %arg2, %c0_i32_2 : i32
    %7 = arith.extui %6 : i1 to i32
    %c0_i32_3 = arith.constant 0 : i32
    %8 = arith.cmpi ne, %7, %c0_i32_3 : i32
    scf.if %8 {
      %c0 = arith.constant 0 : index
      %c0_4 = arith.constant 0 : index
      %c0_5 = arith.constant 0 : index
      %9 = vector.load %arg8[%c0, %c0_4, %c0_5] : memref<4x8x1xf32, #tpu.memory_space<vmem>>, vector<1x8x1xf32>
      %10 = vector.shape_cast %9 : vector<1x8x1xf32> to vector<8x1xf32>
      %11 = tpu.reciprocal %10 {approx = true} : vector<8x1xf32> -> vector<8x1xf32>
      %c0_6 = arith.constant 0 : index
      %c0_7 = arith.constant 0 : index
      %c0_8 = arith.constant 0 : index
      %12 = vector.load %arg9[%c0_6, %c0_7, %c0_8] : memref<4x8x8xf32, #tpu.memory_space<vmem>>, vector<1x8x8xf32>
      %13 = vector.shape_cast %12 : vector<1x8x8xf32> to vector<8x8xf32>
      %14 = vector.broadcast %11 : vector<8x1xf32> to vector<8x8xf32>
      %15 = arith.mulf %13, %14 : vector<8x8xf32>
      %c1 = arith.constant 1 : index
      %c0_9 = arith.constant 0 : index
      %c0_10 = arith.constant 0 : index
      %16 = vector.load %arg8[%c1, %c0_9, %c0_10] : memref<4x8x1xf32, #tpu.memory_space<vmem>>, vector<1x8x1xf32>
      %17 = vector.shape_cast %16 : vector<1x8x1xf32> to vector<8x1xf32>
      %18 = tpu.reciprocal %17 {approx = true} : vector<8x1xf32> -> vector<8x1xf32>
      %c1_11 = arith.constant 1 : index
      %c0_12 = arith.constant 0 : index
      %c0_13 = arith.constant 0 : index
      %19 = vector.load %arg9[%c1_11, %c0_12, %c0_13] : memref<4x8x8xf32, #tpu.memory_space<vmem>>, vector<1x8x8xf32>
      %20 = vector.shape_cast %19 : vector<1x8x8xf32> to vector<8x8xf32>
      %21 = vector.broadcast %18 : vector<8x1xf32> to vector<8x8xf32>
      %22 = arith.mulf %20, %21 : vector<8x8xf32>
      %c2 = arith.constant 2 : index
      %c0_14 = arith.constant 0 : index
      %c0_15 = arith.constant 0 : index
      %23 = vector.load %arg8[%c2, %c0_14, %c0_15] : memref<4x8x1xf32, #tpu.memory_space<vmem>>, vector<1x8x1xf32>
      %24 = vector.shape_cast %23 : vector<1x8x1xf32> to vector<8x1xf32>
      %25 = tpu.reciprocal %24 {approx = true} : vector<8x1xf32> -> vector<8x1xf32>
      %c2_16 = arith.constant 2 : index
      %c0_17 = arith.constant 0 : index
      %c0_18 = arith.constant 0 : index
      %26 = vector.load %arg9[%c2_16, %c0_17, %c0_18] : memref<4x8x8xf32, #tpu.memory_space<vmem>>, vector<1x8x8xf32>
      %27 = vector.shape_cast %26 : vector<1x8x8xf32> to vector<8x8xf32>
      %28 = vector.broadcast %25 : vector<8x1xf32> to vector<8x8xf32>
      %29 = arith.mulf %27, %28 : vector<8x8xf32>
      %c3 = arith.constant 3 : index
      %c0_19 = arith.constant 0 : index
      %c0_20 = arith.constant 0 : index
      %30 = vector.load %arg8[%c3, %c0_19, %c0_20] : memref<4x8x1xf32, #tpu.memory_space<vmem>>, vector<1x8x1xf32>
      %31 = vector.shape_cast %30 : vector<1x8x1xf32> to vector<8x1xf32>
      %32 = tpu.reciprocal %31 {approx = true} : vector<8x1xf32> -> vector<8x1xf32>
      %c3_21 = arith.constant 3 : index
      %c0_22 = arith.constant 0 : index
      %c0_23 = arith.constant 0 : index
      %33 = vector.load %arg9[%c3_21, %c0_22, %c0_23] : memref<4x8x8xf32, #tpu.memory_space<vmem>>, vector<1x8x8xf32>
      %34 = vector.shape_cast %33 : vector<1x8x8xf32> to vector<8x8xf32>
      %35 = vector.broadcast %32 : vector<8x1xf32> to vector<8x8xf32>
      %36 = arith.mulf %34, %35 : vector<8x8xf32>
      %37 = tpu.concatenate %15, %22, %29, %36 in 1 : vector<8x8xf32>, vector<8x8xf32>, vector<8x8xf32>, vector<8x8xf32> -> vector<8x32xf32>
      %38 = arith.truncf %37 : vector<8x32xf32> to vector<8x32xbf16>
      %c0_24 = arith.constant 0 : index
      %c0_25 = arith.constant 0 : index
      %c0_26 = arith.constant 0 : index
      %39 = vector.load %arg6[%c0_24, %c0_25, %c0_26] : memref<1x8x32xbf16, #tpu.memory_space<vmem>>, vector<1x8x32xbf16>
      %40 = vector.shape_cast %39 : vector<1x8x32xbf16> to vector<8x32xbf16>
      %41 = vector.shape_cast %38 : vector<8x32xbf16> to vector<1x8x32xbf16>
      tpu.vector_store %arg6[%c0_24, %c0_25, %c0_26], %41 {strides = array<i32>} : memref<1x8x32xbf16, #tpu.memory_space<vmem>>, vector<1x8x32xbf16>,
    } else {
    }
    return
  }
  func.func @transform_0(%arg0: i32, %arg1: i32, %arg2: i32) -> (i32, i32, i32) {
    %c0_i32 = arith.constant 0 : i32
    %c0_i32_0 = arith.constant 0 : i32
    return %arg0, %arg1, %c0_i32 : i32, i32, i32
  }
  func.func @transform_1(%arg0: i32, %arg1: i32, %arg2: i32) -> (i32, i32, i32) {
    %0 = arith.minsi %arg2, %arg1 : i32
    %c0_i32 = arith.constant 0 : i32
    %c0_i32_0 = arith.constant 0 : i32
    return %arg0, %0, %c0_i32 : i32, i32, i32
  }
  func.func @transform_2(%arg0: i32, %arg1: i32, %arg2: i32) -> (i32, i32, i32) {
    %0 = arith.minsi %arg2, %arg1 : i32
    %c0_i32 = arith.constant 0 : i32
    %c0_i32_0 = arith.constant 0 : i32
    return %arg0, %0, %c0_i32 : i32, i32, i32
  }
  func.func @transform_3(%arg0: i32, %arg1: i32, %arg2: i32) -> (i32, i32, i32) {
    %c0_i32 = arith.constant 0 : i32
    %c0_i32_0 = arith.constant 0 : i32
    return %arg0, %arg1, %c0_i32 : i32, i32, i32
  }
}

</mosaic_0001>

<llo_original>
// kernel: multi_head_atten.3
$region0: #{multi_head_atten.3}
  #allocation0 [shape = 'u32[]', space=smem, size = 0x4, offset = 0x4, fixed_abs, tag = 'smem constant byte address 0x4 - core index']
  #allocation1 [shape = 'u32[144,128]{1,0:T(1,128)}', space=vmem, size = 0x12000, scoped, tag = 'internal scratch']
  #allocation2 [shape = 'f32[16,96]{1,0:T(8,128)}', space=vmem, size = 0x2000, scoped, tag = 'scratch operand']
  %s0 = inlined_call_operand.vmem [shape: bf16[16,32], index: 0, kind: input, shape index: {}]
  %s1 = inlined_call_operand.vmem [shape: bf16[32,96], index: 1, kind: input, shape index: {}]
  %s2 = inlined_call_operand.vmem [shape: bf16[16,96], index: 2, kind: output, shape index: {}]
  %s3 = sld [smem:[#allocation0]]
  $region26: #{multi_head_atten.3} parent=0
    _
  %s5 = ssub.s32 1, %s3
  %s6 = scalar_select 0, %s5, %s3
  // Predicated region
  $region2: #{multi_head_atten.3} parent=0 // pred_check
    _
  $region3: #{multi_head_atten.3} parent=0 // pred_check_branch
    %8 = sbr.rel (0) target = $region5
  $region4: #{multi_head_atten.3} parent=0 // pred_region
    _
  $region5: #{multi_head_atten.3} parent=0 // pred_fallthru
    _
  // Predicated region
  $region6: #{multi_head_atten.3} parent=0 // pred_check
    _
  $region7: #{multi_head_atten.3} parent=0 // pred_check_branch
    %10 = sbr.rel (0) target = $region9
  $region8: #{multi_head_atten.3} parent=0 // pred_region
    _
  $region9: #{multi_head_atten.3} parent=0 // pred_fallthru
    _
  %p12 = scmp.eq.s32.totalorder 0, 0
  // Predicated region
  $region10: #{multi_head_atten.3} parent=0 // pred_check
    %p13 = pneg %p12
  $region11: #{multi_head_atten.3} parent=0 // pred_check_branch
    %15 = sbr.rel (%p13) target = $region13
  $region12: #{multi_head_atten.3} parent=0 // pred_region
    %vm16 = vcmask 785408
    %17 = vst.msk [vmem:[#allocation2] sm:$0xff] %vm16, 0.0
    %18 = vst.msk [vmem:[#allocation2 + $0x8] sm:$0xff] %vm16, 0.0
  $region13: #{multi_head_atten.3} parent=0 // pred_fallthru
    _
  %v19 = vld [vmem:[#allocation2] sm:$0xff]
  %v20 = vld [vmem:[#allocation2 + $0x8] sm:$0xff]
  %v21 = vld [vmem:[%s0] sm:$0xf]
  %v22 = vld [vmem:[%s0 + $0x4] sm:$0xf]
  %v23 = vld [vmem:[%s1] sm:$0xf]
  %v24 = vld [vmem:[%s1 + $0x4] sm:$0xf]
  %v25 = vld [vmem:[%s1 + $0x8] sm:$0xf]
  %v26 = vld [vmem:[%s1 + $0xc] sm:$0xf]
  %v29 = vunpack.c.l.b16 %v21
  %v30 = vunpack.c.l.b16 %v22
  %v31 = vpack.c.b16 %v30, %v29
  %v36 = vunpack.c.l.b16 %v23
  %v37 = vunpack.c.l.b16 %v24
  %v38 = vunpack.c.l.b16 %v25
  %v39 = vunpack.c.l.b16 %v26
  %v40 = vpack.c.b16 %v37, %v36
  %v41 = vpack.c.b16 %v39, %v38
  %vm44 = vcmask 261120
  %v46 = vsel %vm44, %v31, 0
  %48 = vmatprep.subr.bf16.mxu0 0
  %49 = vmatpush1.bf16.msra.mxu0 0
  %50 = vmatprep.subr.bf16.mxu0 0
  %51 = vmatpush1.bf16.msra.mxu0 0
  %52 = vmatprep.subr.bf16.mxu0 0
  %53 = vmatpush1.bf16.msra.mxu0 0
  %54 = vmatprep.subr.bf16.mxu0 0
  %55 = vmatpush1.bf16.msra.mxu0 0
  %56 = vmatprep.subr.bf16.mxu0 0
  %57 = vmatpush1.bf16.msra.mxu0 0
  %58 = vmatprep.subr.bf16.mxu0 0
  %59 = vmatpush1.bf16.msra.mxu0 0
  %60 = vmatprep.subr.bf16.mxu0 0
  %61 = vmatpush1.bf16.msra.mxu0 %v41
  %62 = vmatprep.subr.bf16.mxu0 0
  %63 = vmatpush1.bf16.msra.mxu0 %v40
  %64 = vmatprep.subr.bf16.mxu0 0
  %65 = vmatpush2.bf16.msra.mxu0 0
  %66 = vmatprep.subr.bf16.mxu0 0
  %67 = vmatpush2.bf16.msra.mxu0 0
  %68 = vmatprep.subr.bf16.mxu0 0
  %69 = vmatpush2.bf16.msra.mxu0 0
  %70 = vmatprep.subr.bf16.mxu0 0
  %71 = vmatpush2.bf16.msra.mxu0 0
  %72 = vmatprep.subr.bf16.mxu0 0
  %73 = vmatpush2.bf16.msra.mxu0 0
  %74 = vmatprep.subr.bf16.mxu0 0
  %75 = vmatpush2.bf16.msra.mxu0 0
  %76 = vmatprep.subr.bf16.mxu0 0
  %77 = vmatpush2.bf16.msra.mxu0 0
  %78 = vmatprep.subr.bf16.mxu0 0
  %79 = vmatpush2.bf16.msra.mxu0 0
  %80 = vmatprep.mubr.bf16.mxu0 0
  %81 = vmatmul.mubr.bf16.gmra.mxu0 %v46
  %v82 = vpop.f32.mrf.mxu0
  %v83 = vadd.f32 0.0, %v82
  %v84 = vpop.f32.mrf.mxu0
  %v85 = vpop.f32.mrf.mxu0
  %v86 = vadd.f32 0.0, %v85
  %v87 = vpop.f32.mrf.mxu0
  %88 = vdwg.mxu0
  %v89 = vadd.f32 %v19, %v83
  %v90 = vadd.f32 %v20, %v86
  %vm91 = vcmask 785408
  %92 = vst.msk [vmem:[#allocation2] sm:$0xff] %vm91, %v89
  %93 = vst.msk [vmem:[#allocation2 + $0x8] sm:$0xff] %vm91, %v90
  // Predicated region
  $region14: #{multi_head_atten.3} parent=0 // pred_check
    %p94 = pneg %p12
  $region15: #{multi_head_atten.3} parent=0 // pred_check_branch
    %96 = sbr.rel (%p94) target = $region17
  $region16: #{multi_head_atten.3} parent=0 // pred_region
    %v97 = vld [vmem:[#allocation2] sm:$0xff]
    %v98 = vld [vmem:[#allocation2 + $0x8] sm:$0xff]
    %v99 = vpack.c.bf16 %v98, %v97
    %v101 = vunpack.c.l.b16 %v99
    %v102 = vunpack.c.h.b16 %v99
    %v103 = vpack.c.b16 %v101, %v101
    %v104 = vpack.c.b16 %v102, %v102
    %vm107 = vcmask 781312
    %108 = vst.msk [vmem:[%s2] sm:$0xf] %vm107, %v103
    %109 = vst.msk [vmem:[%s2 + $0x4] sm:$0xf] %vm107, %v104
  $region17: #{multi_head_atten.3} parent=0 // pred_fallthru
    _
  // Predicated region
  $region18: #{multi_head_atten.3} parent=0 // pred_check
    _
  $region19: #{multi_head_atten.3} parent=0 // pred_check_branch
    %111 = sbr.rel (0) target = $region21
  $region20: #{multi_head_atten.3} parent=0 // pred_region
    _
  $region21: #{multi_head_atten.3} parent=0 // pred_fallthru
    _
  // Predicated region
  $region22: #{multi_head_atten.3} parent=0 // pred_check
    _
  $region23: #{multi_head_atten.3} parent=0 // pred_check_branch
    %113 = sbr.rel (0) target = $region25
  $region24: #{multi_head_atten.3} parent=0 // pred_region
    _
  $region25: #{multi_head_atten.3} parent=0 // pred_fallthru
    _

// kernel: multi_head_atten.5
$region0: #{multi_head_atten.5}
  #allocation0 [shape = 'u32[]', space=smem, size = 0x4, offset = 0x4, fixed_abs, tag = 'smem constant byte address 0x4 - core index']
  #allocation1 [shape = 'u32[144,128]{1,0:T(1,128)}', space=vmem, size = 0x12000, scoped, tag = 'internal scratch']
  #allocation2 [shape = 'f32[16,32]{1,0:T(8,128)}', space=vmem, size = 0x2000, scoped, tag = 'scratch operand']
  %s0 = inlined_call_operand.vmem [shape: bf16[16,32], index: 0, kind: input, shape index: {}]
  %s1 = inlined_call_operand.vmem [shape: bf16[32,32], index: 1, kind: input, shape index: {}]
  %s2 = inlined_call_operand.vmem [shape: f32[1,32], index: 2, kind: input, shape index: {}]
  %s3 = inlined_call_operand.hbm [shape: f32[16,32], index: 3, kind: output, shape index: {}]
  %s4 = sld [smem:[#allocation0]]
  $region30: #{multi_head_atten.5} parent=0
    _
  %s6 = ssub.s32 1, %s4
  %s7 = scalar_select 0, %s6, %s4
  $region1: #{multi_head_atten.5} parent=0
    #allocation3 [shape = 'u8[8192]{0}', space=vmem, size = 0x2000, scoped, tag = 'output window, operand 0, single buffered']
    #allocation4 [shape = 's32[1]{0}', space=sflag, size = 0x4, scoped, tag = 'scoped memory for multi_head_atten.5']
    %8 = vsyncpa [#allocation4], 0
    // Predicated region
    $region2: #{multi_head_atten.5} parent=1 // pred_check
      _
    $region3: #{multi_head_atten.5} parent=1 // pred_check_branch
      %10 = sbr.rel (0) target = $region5
    $region4: #{multi_head_atten.5} parent=1 // pred_region
      _
    $region5: #{multi_head_atten.5} parent=1 // pred_fallthru
      _
    // Predicated region
    $region6: #{multi_head_atten.5} parent=1 // pred_check
      _
    $region7: #{multi_head_atten.5} parent=1 // pred_check_branch
      %12 = sbr.rel (0) target = $region9
    $region8: #{multi_head_atten.5} parent=1 // pred_region
      _
    $region9: #{multi_head_atten.5} parent=1 // pred_fallthru
      _
    // Predicated region
    $region10: #{multi_head_atten.5} parent=1 // pred_check
      _
    $region11: #{multi_head_atten.5} parent=1 // pred_check_branch
      %14 = sbr.rel (0) target = $region13
    $region12: #{multi_head_atten.5} parent=1 // pred_region
      _
    $region13: #{multi_head_atten.5} parent=1 // pred_fallthru
      _
    %p16 = scmp.eq.s32.totalorder 0, 0
    // Predicated region
    $region14: #{multi_head_atten.5} parent=1 // pred_check
      %p17 = pneg %p16
    $region15: #{multi_head_atten.5} parent=1 // pred_check_branch
      %19 = sbr.rel (%p17) target = $region17
    $region16: #{multi_head_atten.5} parent=1 // pred_region
      %vm20 = vcmask 261120
      %21 = vst.msk [vmem:[#allocation2] sm:$0xff] %vm20, 0.0
      %22 = vst.msk [vmem:[#allocation2 + $0x8] sm:$0xff] %vm20, 0.0
    $region17: #{multi_head_atten.5} parent=1 // pred_fallthru
      _
    %v23 = vld [vmem:[#allocation2] sm:$0xff]
    %v24 = vld [vmem:[#allocation2 + $0x8] sm:$0xff]
    %v25 = vld [vmem:[%s0] sm:$0xf]
    %v26 = vld [vmem:[%s0 + $0x4] sm:$0xf]
    %v27 = vld [vmem:[%s1] sm:$0xf]
    %v28 = vld [vmem:[%s1 + $0x4] sm:$0xf]
    %v29 = vld [vmem:[%s1 + $0x8] sm:$0xf]
    %v30 = vld [vmem:[%s1 + $0xc] sm:$0xf]
    %v33 = vunpack.c.l.b16 %v25
    %v34 = vunpack.c.l.b16 %v26
    %v35 = vpack.c.b16 %v34, %v33
    %v40 = vunpack.c.l.b16 %v27
    %v41 = vunpack.c.l.b16 %v28
    %v42 = vunpack.c.l.b16 %v29
    %v43 = vunpack.c.l.b16 %v30
    %v44 = vpack.c.b16 %v41, %v40
    %v45 = vpack.c.b16 %v43, %v42
    %vm48 = vcmask 261120
    %v50 = vsel %vm48, %v35, 0
    %52 = vmatprep.subr.bf16.mxu0 0
    %53 = vmatpush1.bf16.msra.mxu0 0
    %54 = vmatprep.subr.bf16.mxu0 0
    %55 = vmatpush1.bf16.msra.mxu0 0
    %56 = vmatprep.subr.bf16.mxu0 0
    %57 = vmatpush1.bf16.msra.mxu0 0
    %58 = vmatprep.subr.bf16.mxu0 0
    %59 = vmatpush1.bf16.msra.mxu0 0
    %60 = vmatprep.subr.bf16.mxu0 0
    %61 = vmatpush1.bf16.msra.mxu0 0
    %62 = vmatprep.subr.bf16.mxu0 0
    %63 = vmatpush1.bf16.msra.mxu0 0
    %64 = vmatprep.subr.bf16.mxu0 0
    %65 = vmatpush1.bf16.msra.mxu0 %v45
    %66 = vmatprep.subr.bf16.mxu0 0
    %67 = vmatpush1.bf16.msra.mxu0 %v44
    %68 = vmatprep.subr.bf16.mxu0 0
    %69 = vmatpush2.bf16.msra.mxu0 0
    %70 = vmatprep.subr.bf16.mxu0 0
    %71 = vmatpush2.bf16.msra.mxu0 0
    %72 = vmatprep.subr.bf16.mxu0 0
    %73 = vmatpush2.bf16.msra.mxu0 0
    %74 = vmatprep.subr.bf16.mxu0 0
    %75 = vmatpush2.bf16.msra.mxu0 0
    %76 = vmatprep.subr.bf16.mxu0 0
    %77 = vmatpush2.bf16.msra.mxu0 0
    %78 = vmatprep.subr.bf16.mxu0 0
    %79 = vmatpush2.bf16.msra.mxu0 0
    %80 = vmatprep.subr.bf16.mxu0 0
    %81 = vmatpush2.bf16.msra.mxu0 0
    %82 = vmatprep.subr.bf16.mxu0 0
    %83 = vmatpush2.bf16.msra.mxu0 0
    %84 = vmatprep.mubr.bf16.mxu0 0
    %85 = vmatmul.mubr.bf16.gmra.mxu0 %v50
    %v86 = vpop.f32.mrf.mxu0
    %v87 = vadd.f32 0.0, %v86
    %v88 = vpop.f32.mrf.mxu0
    %v89 = vpop.f32.mrf.mxu0
    %v90 = vadd.f32 0.0, %v89
    %v91 = vpop.f32.mrf.mxu0
    %92 = vdwg.mxu0
    %v93 = vadd.f32 %v23, %v87
    %v94 = vadd.f32 %v24, %v90
    %95 = vst.msk [vmem:[#allocation2] sm:$0xff] %vm48, %v93
    %96 = vst.msk [vmem:[#allocation2 + $0x8] sm:$0xff] %vm48, %v94
    // Predicated region
    $region18: #{multi_head_atten.5} parent=1 // pred_check
      %p97 = pneg %p16
    $region19: #{multi_head_atten.5} parent=1 // pred_check_branch
      %99 = sbr.rel (%p97) target = $region21
    $region20: #{multi_head_atten.5} parent=1 // pred_region
      %v100 = vld [vmem:[#allocation2] sm:$0xff]
      %v101 = vld [vmem:[#allocation2 + $0x8] sm:$0xff]
      %v102 = vld [vmem:[%s2] sm:$0x1]
      %v104 = vlaneseq
      %v105 = vshrl.u32 %v104, 7
      %v106 = vsub.s32 0, %v105
      %v107 = vrot.slane %v102, %v106
      %v109 = vadd.f32 %v100, %v107
      %v110 = vadd.f32 %v101, %v107
      %111 = vst.msk [vmem:[#allocation3] sm:$0xff] %vm48, %v109
      %112 = vst.msk [vmem:[#allocation3 + $0x8] sm:$0xff] %vm48, %v110
    $region21: #{multi_head_atten.5} parent=1 // pred_fallthru
      _
    // Predicated region
    $region22: #{multi_head_atten.5} parent=1 // pred_check
      _
    $region23: #{multi_head_atten.5} parent=1 // pred_check_branch
      %114 = sbr.rel (0) target = $region25
    $region24: #{multi_head_atten.5} parent=1 // pred_region
      %s116 = ssub.s32 256, 256
      %117 = vsyncadd [#allocation4], %s116
      %s118 = sshll.u32 [#allocation3], 4
      %s119 = int_to_ptr.vmem [resolvable:$true] %s118
      %124 = dma.vmem_to_hbm [thread:$0]  %s119, 256, %s3, [#allocation4], 128, 128, 8
    $region25: #{multi_head_atten.5} parent=1 // pred_fallthru
      _
    // Predicated region
    $region26: #{multi_head_atten.5} parent=1 // pred_check
      _
    $region27: #{multi_head_atten.5} parent=1 // pred_check_branch
      %126 = sbr.rel (0) target = $region29
    $region28: #{multi_head_atten.5} parent=1 // pred_region
      %127 = dma.done [#allocation4], 256
    $region29: #{multi_head_atten.5} parent=1 // pred_fallthru
      _
    %128 = vsyncpa [#allocation4], 1

// kernel: multi_head_atten.4
$region0: #{multi_head_atten.4}
  #allocation0 [shape = 'u32[]', space=smem, size = 0x4, offset = 0x4, fixed_abs, tag = 'smem constant byte address 0x4 - core index']
  #allocation1 [shape = 'u32[144,128]{1,0:T(1,128)}', space=vmem, size = 0x12000, scoped, tag = 'internal scratch']
  #allocation2 [shape = 'f32[4,8,1]{2,1,0:T(8,128)}', space=vmem, size = 0x4000, scoped, tag = 'scratch operand']
  #allocation3 [shape = 'f32[4,8,1]{2,1,0:T(8,128)}', space=vmem, size = 0x4000, scoped, tag = 'scratch operand']
  #allocation4 [shape = 'f32[4,8,8]{2,1,0:T(8,128)}', space=vmem, size = 0x4000, scoped, tag = 'scratch operand']
  %s0 = inlined_call_operand.vmem [shape: bf16[2,8,96], index: 0, kind: input, shape index: {}, may-alias: {0,1,2}]
  %s1 = inlined_call_operand.vmem [shape: bf16[2,8,96], index: 1, kind: input, shape index: {}, may-alias: {0,1,2}]
  %s2 = inlined_call_operand.vmem [shape: bf16[2,8,96], index: 2, kind: input, shape index: {}, may-alias: {0,1,2}]
  %s3 = inlined_call_operand.vmem [shape: bf16[2,8,32], index: 3, kind: output, shape index: {}]
  %s4 = sld [smem:[#allocation0]]
  $region57: #{multi_head_atten.4} parent=0
    _
  %s6 = ssub.s32 1, %s4
  %s7 = scalar_select 0, %s6, %s4
  loop: start=0, step=1, limit=4
  $region2: #{multi_head_atten.4} parent=0 // loop_pre_header
    _
  $region3: #{multi_head_atten.4} parent=0 // loop_header
    %s9 = sphi 0, %s13
    %p10 = scmp.ge.s32.totalorder %s9, 4
    %s16 = sphi 0, %s35
    %s17 = sphi 0, %s31
    %s18 = sphi 0, %s27
    %s19 = sphi 0, %s16
    %s20 = sphi 0, %s17
    %s21 = sphi 0, %s18
    %s22 = sphi 0, %s19
    %s23 = sphi 0, %s20
    %s24 = sphi 0, %s21
    %s40 = sphi 0, %s42
    %s43 = sphi 0, %s40
    %s44 = sphi 0, %s43
    %s60 = sphi 0, %s44
    %s72 = sphi 0, %s74
    %s75 = sphi 0, %s72
    %s76 = sphi 0, %s75
    %s92 = sphi 0, %s76
    %s104 = sphi 0, %s106
    %s107 = sphi 0, %s104
    %s108 = sphi 0, %s107
    %s124 = sphi 0, %s108
    %s132 = sphi 0, %s134
    %s135 = sphi 0, %s132
    %s136 = sphi 0, %s135
    %s152 = sphi 0, %s136
  $region4: #{multi_head_atten.4} parent=0 // loop_header_branch
    %12 = sbr.rel (%p10) target = $region8
  $region5: #{multi_head_atten.4} parent=0 // loop_body
    %s14 = ssub.s32 %s9, 1
    %s15 = ssub.s32 %s9, 2
    %s25 = sadd.s32 1, %s18
    %p26 = scmp.ge.s32.totalorder %s25, 1
    %s27 = scalar_select %p26, 0, %s25
    %s28 = sadd.s32 1, %s17
    %s29 = scalar_select %p26, %s28, %s17
    %p30 = scmp.ge.s32.totalorder %s29, 1
    %s31 = scalar_select %p30, 0, %s29
    %s32 = sadd.s32 1, %s16
    %s33 = scalar_select %p30, %s32, %s16
    %p34 = scmp.ge.s32.totalorder %s33, 2
    %s35 = scalar_select %p34, 0, %s33
    %s36 = ssub.s32 %s16, %s35
    %s37 = ssub.s32 %s17, %s31
    %s38 = sor.u32 %s36, %s37
    %p39 = scmp.eq.s32.totalorder %s38, 0
    %s41 = sadd.s32 %s40, 1
    %s42 = scalar_select %p39, %s40, %s41
    %p45 = pneg %p39
    %p46 = scmp.eq.s32.totalorder %s9, 1
    %p47 = por %p45, %p46
    %p48 = scmp.ne.s32.totalorder %s40, %s43
    %p49 = scmp.eq.s32.totalorder %s9, 0
    %p50 = por %p48, %p49
    %p51 = scmp.ne.s32.totalorder %s40, %s43
    %p52 = scmp.eq.s32.totalorder %s14, 1
    %p53 = por %p51, %p52
    %p54 = scmp.ne.s32.totalorder %s43, %s44
    %p55 = scmp.eq.s32.totalorder %s14, 0
    %p56 = por %p54, %p55
    %p57 = scmp.ne.s32.totalorder %s43, %s44
    %p58 = scmp.eq.s32.totalorder %s15, 1
    %p59 = por %p57, %p58
    %p61 = scmp.ne.s32.totalorder %s44, %s60
    %p62 = scmp.eq.s32.totalorder %s15, 0
    %p63 = por %p61, %p62
    %p64 = scmp.lt.s32.totalorder %s18, %s17
    %s65 = scalar_select %p64, %s18, %s17
    %p66 = scmp.lt.s32.totalorder %s27, %s31
    %s67 = scalar_select %p66, %s27, %s31
    %s68 = ssub.s32 %s16, %s35
    %s69 = ssub.s32 %s65, %s67
    %s70 = sor.u32 %s68, %s69
    %p71 = scmp.eq.s32.totalorder %s70, 0
    %s73 = sadd.s32 %s72, 1
    %s74 = scalar_select %p71, %s72, %s73
    %p77 = pneg %p71
    %p78 = scmp.eq.s32.totalorder %s9, 1
    %p79 = por %p77, %p78
    %p80 = scmp.ne.s32.totalorder %s72, %s75
    %p81 = scmp.eq.s32.totalorder %s9, 0
    %p82 = por %p80, %p81
    %p83 = scmp.ne.s32.totalorder %s72, %s75
    %p84 = scmp.eq.s32.totalorder %s14, 1
    %p85 = por %p83, %p84
    %p86 = scmp.ne.s32.totalorder %s75, %s76
    %p87 = scmp.eq.s32.totalorder %s14, 0
    %p88 = por %p86, %p87
    %p89 = scmp.ne.s32.totalorder %s75, %s76
    %p90 = scmp.eq.s32.totalorder %s15, 1
    %p91 = por %p89, %p90
    %p93 = scmp.ne.s32.totalorder %s76, %s92
    %p94 = scmp.eq.s32.totalorder %s15, 0
    %p95 = por %p93, %p94
    %p96 = scmp.lt.s32.totalorder %s18, %s17
    %s97 = scalar_select %p96, %s18, %s17
    %p98 = scmp.lt.s32.totalorder %s27, %s31
    %s99 = scalar_select %p98, %s27, %s31
    %s100 = ssub.s32 %s16, %s35
    %s101 = ssub.s32 %s97, %s99
    %s102 = sor.u32 %s100, %s101
    %p103 = scmp.eq.s32.totalorder %s102, 0
    %s105 = sadd.s32 %s104, 1
    %s106 = scalar_select %p103, %s104, %s105
    %p109 = pneg %p103
    %p110 = scmp.eq.s32.totalorder %s9, 1
    %p111 = por %p109, %p110
    %p112 = scmp.ne.s32.totalorder %s104, %s107
    %p113 = scmp.eq.s32.totalorder %s9, 0
    %p114 = por %p112, %p113
    %p115 = scmp.ne.s32.totalorder %s104, %s107
    %p116 = scmp.eq.s32.totalorder %s14, 1
    %p117 = por %p115, %p116
    %p118 = scmp.ne.s32.totalorder %s107, %s108
    %p119 = scmp.eq.s32.totalorder %s14, 0
    %p120 = por %p118, %p119
    %p121 = scmp.ne.s32.totalorder %s107, %s108
    %p122 = scmp.eq.s32.totalorder %s15, 1
    %p123 = por %p121, %p122
    %p125 = scmp.ne.s32.totalorder %s108, %s124
    %p126 = scmp.eq.s32.totalorder %s15, 0
    %p127 = por %p125, %p126
    %s128 = ssub.s32 %s16, %s35
    %s129 = ssub.s32 %s17, %s31
    %s130 = sor.u32 %s128, %s129
    %p131 = scmp.eq.s32.totalorder %s130, 0
    %s133 = sadd.s32 %s132, 1
    %s134 = scalar_select %p131, %s132, %s133
    %p137 = pneg %p131
    %p138 = scmp.eq.s32.totalorder %s9, 1
    %p139 = por %p137, %p138
    %p140 = scmp.ne.s32.totalorder %s132, %s135
    %p141 = scmp.eq.s32.totalorder %s9, 0
    %p142 = por %p140, %p141
    %p143 = scmp.ne.s32.totalorder %s132, %s135
    %p144 = scmp.eq.s32.totalorder %s14, 1
    %p145 = por %p143, %p144
    %p146 = scmp.ne.s32.totalorder %s135, %s136
    %p147 = scmp.eq.s32.totalorder %s14, 0
    %p148 = por %p146, %p147
    %p149 = scmp.ne.s32.totalorder %s135, %s136
    %p150 = scmp.eq.s32.totalorder %s15, 1
    %p151 = por %p149, %p150
    %p153 = scmp.ne.s32.totalorder %s136, %s152
    %p154 = scmp.eq.s32.totalorder %s15, 0
    %p155 = por %p153, %p154
    %p156 = scmp.le.s32.totalorder 1, %s9
    %p157 = scmp.lt.s32.totalorder %s9, 3
    %p158 = pnand %p156, %p157
    %p159 = pneg %p158
    // Predicated region
    $region9: #{multi_head_atten.4} parent=5 // pred_check
      _
    $region10: #{multi_head_atten.4} parent=5 // pred_check_branch
      %161 = sbr.rel (%p158) target = $region12
    $region11: #{multi_head_atten.4} parent=5 // pred_region
      %s162 = ssub.s32 %s9, 1
    $region12: #{multi_head_atten.4} parent=5 // pred_fallthru
      _
    %p163 = scmp.lt.s32.totalorder %s9, 2
    // Predicated region
    $region13: #{multi_head_atten.4} parent=5 // pred_check
      %p164 = pneg %p163
    $region14: #{multi_head_atten.4} parent=5 // pred_check_branch
      %166 = sbr.rel (%p164) target = $region16
    $region15: #{multi_head_atten.4} parent=5 // pred_region
      // Predicated region
      $region17: #{multi_head_atten.4} parent=15 // pred_check
        %p167 = pneg %p50
      $region18: #{multi_head_atten.4} parent=15 // pred_check_branch
        %169 = sbr.rel (%p167) target = $region20
      $region19: #{multi_head_atten.4} parent=15 // pred_region
        %p170 = scmp.lt.s32.totalorder %s16, 1
        %s171 = scalar_select %p170, %s16, 1
        %p172 = scmp.lt.s32.totalorder %s17, 0
        %s173 = scalar_select %p172, %s17, 0
        %s174 = sadd.s32 %s173, %s171
        %s175 = smul.addr %s174, 4
        %s176 = scalar_lea.vmem %s0, %s175
      $region20: #{multi_head_atten.4} parent=15 // pred_fallthru
        _
      // Predicated region
      $region21: #{multi_head_atten.4} parent=15 // pred_check
        %p177 = pneg %p82
      $region22: #{multi_head_atten.4} parent=15 // pred_check_branch
        %179 = sbr.rel (%p177) target = $region24
      $region23: #{multi_head_atten.4} parent=15 // pred_region
        %p180 = scmp.lt.s32.totalorder %s18, %s17
        %s181 = scalar_select %p180, %s18, %s17
        %p182 = scmp.lt.s32.totalorder %s16, 1
        %s183 = scalar_select %p182, %s16, 1
        %p184 = scmp.lt.s32.totalorder %s181, 0
        %s185 = scalar_select %p184, %s181, 0
        %s186 = sadd.s32 %s185, %s183
        %s187 = smul.addr %s186, 4
        %s188 = scalar_lea.vmem %s1, %s187
        %p189 = scmp.lt.s32.totalorder %s18, %s17
        %s190 = scalar_select %p189, %s18, %s17
      $region24: #{multi_head_atten.4} parent=15 // pred_fallthru
        _
      // Predicated region
      $region25: #{multi_head_atten.4} parent=15 // pred_check
        %p191 = pneg %p114
      $region26: #{multi_head_atten.4} parent=15 // pred_check_branch
        %193 = sbr.rel (%p191) target = $region28
      $region27: #{multi_head_atten.4} parent=15 // pred_region
        %p194 = scmp.lt.s32.totalorder %s18, %s17
        %s195 = scalar_select %p194, %s18, %s17
        %p196 = scmp.lt.s32.totalorder %s16, 1
        %s197 = scalar_select %p196, %s16, 1
        %p198 = scmp.lt.s32.totalorder %s195, 0
        %s199 = scalar_select %p198, %s195, 0
        %s200 = sadd.s32 %s199, %s197
        %s201 = smul.addr %s200, 4
        %s202 = scalar_lea.vmem %s2, %s201
        %p203 = scmp.lt.s32.totalorder %s18, %s17
        %s204 = scalar_select %p203, %s18, %s17
      $region28: #{multi_head_atten.4} parent=15 // pred_fallthru
        _
    $region16: #{multi_head_atten.4} parent=5 // pred_fallthru
      _
    %p205 = scmp.le.s32.totalorder 1, %s9
    %p206 = scmp.lt.s32.totalorder %s9, 3
    %p207 = pnand %p205, %p206
    %p208 = pneg %p207
    // Predicated region
    $region29: #{multi_head_atten.4} parent=5 // pred_check
      _
    $region30: #{multi_head_atten.4} parent=5 // pred_check_branch
      %210 = sbr.rel (%p207) target = $region32
    $region31: #{multi_head_atten.4} parent=5 // pred_region
      %s211 = ssub.s32 %s9, 1
      %p212 = scmp.lt.s32.totalorder %s19, 1
      %s213 = scalar_select %p212, %s19, 1
      %p214 = scmp.lt.s32.totalorder %s20, 0
      %s215 = scalar_select %p214, %s20, 0
      %s216 = sadd.s32 %s215, %s213
      %s217 = smul.addr %s216, 4
      %s218 = scalar_lea.vmem %s0, %s217
      %p219 = pneg %p56
      %p220 = pneg %p53
      %p221 = scmp.lt.s32.totalorder %s21, %s20
      %s222 = scalar_select %p221, %s21, %s20
      %p223 = scmp.lt.s32.totalorder %s19, 1
      %s224 = scalar_select %p223, %s19, 1
      %p225 = scmp.lt.s32.totalorder %s222, 0
      %s226 = scalar_select %p225, %s222, 0
      %s227 = sadd.s32 %s226, %s224
      %s228 = smul.addr %s227, 4
      %s229 = scalar_lea.vmem %s1, %s228
      %p230 = pneg %p88
      %p231 = pneg %p85
      %p232 = scmp.lt.s32.totalorder %s21, %s20
      %s233 = scalar_select %p232, %s21, %s20
      %p234 = scmp.lt.s32.totalorder %s19, 1
      %s235 = scalar_select %p234, %s19, 1
      %p236 = scmp.lt.s32.totalorder %s233, 0
      %s237 = scalar_select %p236, %s233, 0
      %s238 = sadd.s32 %s237, %s235
      %s239 = smul.addr %s238, 4
      %s240 = scalar_lea.vmem %s2, %s239
      %p241 = pneg %p120
      %p242 = pneg %p117
      %p243 = pneg %p148
      %p244 = pneg %p145
      %p245 = scmp.lt.s32.totalorder %s19, 1
      %s246 = scalar_select %p245, %s19, 1
      %p247 = scmp.lt.s32.totalorder %s20, 0
      %s248 = scalar_select %p247, %s20, 0
      %s249 = sadd.s32 %s248, %s246
      %s250 = smul.addr %s249, 4
      %s251 = scalar_lea.vmem %s3, %s250
      %p252 = scmp.lt.s32.totalorder %s19, 1
      %s253 = scalar_select %p252, %s19, 1
      %p254 = scmp.lt.s32.totalorder %s20, 0
      %s255 = scalar_select %p254, %s20, 0
      %s256 = sadd.s32 %s255, %s253
      %s257 = smul.addr %s256, 4
      %s258 = scalar_lea.vmem %s0, %s257
      %p259 = scmp.lt.s32.totalorder %s21, %s20
      %s260 = scalar_select %p259, %s21, %s20
      %p261 = scmp.lt.s32.totalorder %s19, 1
      %s262 = scalar_select %p261, %s19, 1
      %p263 = scmp.lt.s32.totalorder %s260, 0
      %s264 = scalar_select %p263, %s260, 0
      %s265 = sadd.s32 %s264, %s262
      %s266 = smul.addr %s265, 4
      %s267 = scalar_lea.vmem %s1, %s266
      %p268 = scmp.lt.s32.totalorder %s21, %s20
      %s269 = scalar_select %p268, %s21, %s20
      %p270 = scmp.lt.s32.totalorder %s21, %s20
      %s271 = scalar_select %p270, %s21, %s20
      %p272 = scmp.lt.s32.totalorder %s19, 1
      %s273 = scalar_select %p272, %s19, 1
      %p274 = scmp.lt.s32.totalorder %s271, 0
      %s275 = scalar_select %p274, %s271, 0
      %s276 = sadd.s32 %s275, %s273
      %s277 = smul.addr %s276, 4
      %s278 = scalar_lea.vmem %s2, %s277
      %p279 = scmp.lt.s32.totalorder %s21, %s20
      %s280 = scalar_select %p279, %s21, %s20
      %p281 = scmp.lt.s32.totalorder %s19, 1
      %s282 = scalar_select %p281, %s19, 1
      %p283 = scmp.lt.s32.totalorder %s20, 0
      %s284 = scalar_select %p283, %s20, 0
      %s285 = sadd.s32 %s284, %s282
      %s286 = smul.addr %s285, 4
      %s287 = scalar_lea.vmem %s3, %s286
      %p289 = scmp.eq.s32.totalorder %s21, 0
      // Predicated region
      $region33: #{multi_head_atten.4} parent=31 // pred_check
        %p290 = pneg %p289
      $region34: #{multi_head_atten.4} parent=31 // pred_check_branch
        %292 = sbr.rel (%p290) target = $region36
      $region35: #{multi_head_atten.4} parent=31 // pred_region
        %vm293 = vcmask 7168
        %294 = vst.msk [vmem:[#allocation2] sm:$0xff] %vm293, -1e+30
        %295 = vst.msk [vmem:[#allocation2 + $0x8] sm:$0xff] %vm293, -1e+30
        %296 = vst.msk [vmem:[#allocation2 + $0x10] sm:$0xff] %vm293, -1e+30
        %297 = vst.msk [vmem:[#allocation2 + $0x18] sm:$0xff] %vm293, -1e+30
        %298 = vst.msk [vmem:[#allocation3] sm:$0xff] %vm293, 0.0
        %299 = vst.msk [vmem:[#allocation3 + $0x8] sm:$0xff] %vm293, 0.0
        %300 = vst.msk [vmem:[#allocation3 + $0x10] sm:$0xff] %vm293, 0.0
        %301 = vst.msk [vmem:[#allocation3 + $0x18] sm:$0xff] %vm293, 0.0
        %vm302 = vcmask 64512
        %303 = vst.msk [vmem:[#allocation4] sm:$0xff] %vm302, 0.0
        %304 = vst.msk [vmem:[#allocation4 + $0x8] sm:$0xff] %vm302, 0.0
        %305 = vst.msk [vmem:[#allocation4 + $0x10] sm:$0xff] %vm302, 0.0
        %306 = vst.msk [vmem:[#allocation4 + $0x18] sm:$0xff] %vm302, 0.0
      $region36: #{multi_head_atten.4} parent=31 // pred_fallthru
        _
      %p307 = scmp.le.s32.totalorder %s21, %s20
      // Predicated region
      $region37: #{multi_head_atten.4} parent=31 // pred_check
        %p308 = pneg %p307
      $region38: #{multi_head_atten.4} parent=31 // pred_check_branch
        %310 = sbr.rel (%p308) target = $region40
      $region39: #{multi_head_atten.4} parent=31 // pred_region
        %v311 = vld [vmem:[%s258] sm:$0xf]
        %v312 = vld [vmem:[%s267] sm:$0xf]
        %v313 = vld [vmem:[%s278] sm:$0xf]
        %s314 = smul.u32 %s20, 8
        %v315 = vlaneseq
        %v316 = vshrl.u32 %v315, 7
        %v317 = vstv %s314
        %v318 = vadd.s32 %v317, %v316
        %s319 = smul.u32 %s21, 8
        %v320 = vlaneseq
        %v321 = vand.u32 %v320, 127
        %v322 = vstv %s319
        %v323 = vadd.s32 %v322, %v321
        %vm324 = vcmp.le.s32.totalorder %v323, %v318
        %v326 = vunpack.c.l.b16 %v312
        %v327 = vpack.c.b16 %v326, %v326
        %328 = vrot.lane.b32.xlu0 %v327, 96
        %v329 = vpop.permute.xlu0 %328
        %vm330 = vcmask 64512
        %v332 = vsel %vm330, %v311, 0
        %v335 = vsel %vm330, %v329, 0
        %337 = vmatprep.subr.bf16.mxu0 0
        %338 = vmatpush1.bf16.xpose.msra.mxu0 0
        %339 = vmatprep.subr.bf16.mxu0 0
        %340 = vmatpush1.bf16.xpose.msra.mxu0 0
        %341 = vmatprep.subr.bf16.mxu0 0
        %342 = vmatpush1.bf16.xpose.msra.mxu0 0
        %343 = vmatprep.subr.bf16.mxu0 0
        %344 = vmatpush1.bf16.xpose.msra.mxu0 0
        %345 = vmatprep.subr.bf16.mxu0 0
        %346 = vmatpush1.bf16.xpose.msra.mxu0 0
        %347 = vmatprep.subr.bf16.mxu0 0
        %348 = vmatpush1.bf16.xpose.msra.mxu0 0
        %349 = vmatprep.subr.bf16.mxu0 0
        %350 = vmatpush1.bf16.xpose.msra.mxu0 0
        %351 = vmatprep.subr.bf16.mxu0 0
        %352 = vmatpush1.bf16.xpose.msra.mxu0 %v335
        %353 = vmatprep.subr.bf16.mxu0 0
        %354 = vmatpush2.bf16.xpose.msra.mxu0 0
        %355 = vmatprep.subr.bf16.mxu0 0
        %356 = vmatpush2.bf16.xpose.msra.mxu0 0
        %357 = vmatprep.subr.bf16.mxu0 0
        %358 = vmatpush2.bf16.xpose.msra.mxu0 0
        %359 = vmatprep.subr.bf16.mxu0 0
        %360 = vmatpush2.bf16.xpose.msra.mxu0 0
        %361 = vmatprep.subr.bf16.mxu0 0
        %362 = vmatpush2.bf16.xpose.msra.mxu0 0
        %363 = vmatprep.subr.bf16.mxu0 0
        %364 = vmatpush2.bf16.xpose.msra.mxu0 0
        %365 = vmatprep.subr.bf16.mxu0 0
        %366 = vmatpush2.bf16.xpose.msra.mxu0 0
        %367 = vmatprep.subr.bf16.mxu0 0
        %368 = vmatpush2.bf16.xpose.msra.mxu0 0
        %369 = vmatprep.mubr.bf16.mxu0 0
        %370 = vmatmul.mubr.bf16.gmra.mxu0 %v332
        %v371 = vpop.f32.mrf.mxu0
        %v372 = vadd.f32 0.0, %v371
        %v373 = vpop.f32.mrf.mxu0
        %v374 = vpop.f32.mrf.mxu0
        %v375 = vpop.f32.mrf.mxu0
        %376 = vdwg.mxu0
        %v377 = vsel %vm324, %v372, -1e+30
        %v378 = vld [vmem:[#allocation2] sm:$0xff]
        %v379 = vsel %vm330, %v377, -inf
        %380 = vmax.xlane.f32.xlu0 %v379
        %v381 = vpop.xlane.xlu0 %380
        %v382 = vmax.f32 %v378, %v381
        %v383 = vsub.f32 %v378, %v382
        %v384 = vmul.f32 %v383, 1.442695
        %v385 = vpow.pop %v384
        %387 = vset.pattern.permute.xlu0 0
        %388 = vperm.xlu0 %387, %v382
        %v389 = vpop.permute.xlu0 %388
        %v391 = vsub.f32 %v377, %v389
        %v392 = vmul.f32 %v391, 1.442695
        %v393 = vpow.pop %v392
        %v394 = vld [vmem:[#allocation3] sm:$0xff]
        %v395 = vmul.f32 %v385, %v394
        %v396 = vsel %vm330, %v393, 0.0
        %397 = vadd.xlane.f32.xlu0 %v396
        %v398 = vpop.xlane.xlu0 %397
        %v399 = vadd.f32 %v395, %v398
        %vm400 = vcmask 7168
        %401 = vst.msk [vmem:[#allocation3] sm:$0xff] %vm400, %v399
        %v402 = vld [vmem:[#allocation4] sm:$0xff]
        %404 = vset.pattern.permute.xlu0 0
        %405 = vperm.xlu0 %404, %v385
        %v406 = vpop.permute.xlu0 %405
        %v408 = vmul.f32 %v406, %v402
        %v409 = vpack.c.bf16 %v393, %v393
        %v411 = vunpack.c.l.b16 %v313
        %v412 = vpack.c.b16 %v411, %v411
        %413 = vrot.lane.b32.xlu0 %v412, 64
        %v414 = vpop.permute.xlu0 %413
        %v416 = vsel %vm330, %v409, 0
        %vm418 = vcmask 1043456
        %v420 = vsel %vm418, %v414, 0
        %422 = vmatprep.subr.bf16.mxu0 0
        %423 = vmatpush1.bf16.msra.mxu0 0
        %424 = vmatprep.subr.bf16.mxu0 0
        %425 = vmatpush1.bf16.msra.mxu0 0
        %426 = vmatprep.subr.bf16.mxu0 0
        %427 = vmatpush1.bf16.msra.mxu0 0
        %428 = vmatprep.subr.bf16.mxu0 0
        %429 = vmatpush1.bf16.msra.mxu0 0
        %430 = vmatprep.subr.bf16.mxu0 0
        %431 = vmatpush1.bf16.msra.mxu0 0
        %432 = vmatprep.subr.bf16.mxu0 0
        %433 = vmatpush1.bf16.msra.mxu0 0
        %434 = vmatprep.subr.bf16.mxu0 0
        %435 = vmatpush1.bf16.msra.mxu0 0
        %436 = vmatprep.subr.bf16.mxu0 0
        %437 = vmatpush1.bf16.msra.mxu0 %v420
        %438 = vmatprep.subr.bf16.mxu0 0
        %439 = vmatpush2.bf16.msra.mxu0 0
        %440 = vmatprep.subr.bf16.mxu0 0
        %441 = vmatpush2.bf16.msra.mxu0 0
        %442 = vmatprep.subr.bf16.mxu0 0
        %443 = vmatpush2.bf16.msra.mxu0 0
        %444 = vmatprep.subr.bf16.mxu0 0
        %445 = vmatpush2.bf16.msra.mxu0 0
        %446 = vmatprep.subr.bf16.mxu0 0
        %447 = vmatpush2.bf16.msra.mxu0 0
        %448 = vmatprep.subr.bf16.mxu0 0
        %449 = vmatpush2.bf16.msra.mxu0 0
        %450 = vmatprep.subr.bf16.mxu0 0
        %451 = vmatpush2.bf16.msra.mxu0 0
        %452 = vmatprep.subr.bf16.mxu0 0
        %453 = vmatpush2.bf16.msra.mxu0 0
        %454 = vmatprep.mubr.bf16.mxu0 0
        %455 = vmatmul.mubr.bf16.gmra.mxu0 %v416
        %v456 = vpop.f32.mrf.mxu0
        %v457 = vadd.f32 0.0, %v456
        %v458 = vpop.f32.mrf.mxu0
        %v459 = vpop.f32.mrf.mxu0
        %v460 = vpop.f32.mrf.mxu0
        %461 = vdwg.mxu0
        %v462 = vadd.f32 %v408, %v457
        %463 = vst.msk [vmem:[#allocation4] sm:$0xff] %vm330, %v462
        %464 = vst.msk [vmem:[#allocation2] sm:$0xff] %vm400, %v382
        %v466 = vunpack.c.l.b16 %v311
        %v467 = vpack.c.b16 %v466, %v466
        %468 = vrot.lane.b32.xlu0 %v467, 120
        %v469 = vpop.permute.xlu0 %468
        %470 = vrot.lane.b32.xlu0 %v327, 88
        %v471 = vpop.permute.xlu0 %470
        %v473 = vsel %vm330, %v469, 0
        %v476 = vsel %vm330, %v471, 0
        %478 = vmatprep.subr.bf16.mxu0 0
        %479 = vmatpush1.bf16.xpose.msra.mxu0 0
        %480 = vmatprep.subr.bf16.mxu0 0
        %481 = vmatpush1.bf16.xpose.msra.mxu0 0
        %482 = vmatprep.subr.bf16.mxu0 0
        %483 = vmatpush1.bf16.xpose.msra.mxu0 0
        %484 = vmatprep.subr.bf16.mxu0 0
        %485 = vmatpush1.bf16.xpose.msra.mxu0 0
        %486 = vmatprep.subr.bf16.mxu0 0
        %487 = vmatpush1.bf16.xpose.msra.mxu0 0
        %488 = vmatprep.subr.bf16.mxu0 0
        %489 = vmatpush1.bf16.xpose.msra.mxu0 0
        %490 = vmatprep.subr.bf16.mxu0 0
        %491 = vmatpush1.bf16.xpose.msra.mxu0 0
        %492 = vmatprep.subr.bf16.mxu0 0
        %493 = vmatpush1.bf16.xpose.msra.mxu0 %v476
        %494 = vmatprep.subr.bf16.mxu0 0
        %495 = vmatpush2.bf16.xpose.msra.mxu0 0
        %496 = vmatprep.subr.bf16.mxu0 0
        %497 = vmatpush2.bf16.xpose.msra.mxu0 0
        %498 = vmatprep.subr.bf16.mxu0 0
        %499 = vmatpush2.bf16.xpose.msra.mxu0 0
        %500 = vmatprep.subr.bf16.mxu0 0
        %501 = vmatpush2.bf16.xpose.msra.mxu0 0
        %502 = vmatprep.subr.bf16.mxu0 0
        %503 = vmatpush2.bf16.xpose.msra.mxu0 0
        %504 = vmatprep.subr.bf16.mxu0 0
        %505 = vmatpush2.bf16.xpose.msra.mxu0 0
        %506 = vmatprep.subr.bf16.mxu0 0
        %507 = vmatpush2.bf16.xpose.msra.mxu0 0
        %508 = vmatprep.subr.bf16.mxu0 0
        %509 = vmatpush2.bf16.xpose.msra.mxu0 0
        %510 = vmatprep.mubr.bf16.mxu0 0
        %511 = vmatmul.mubr.bf16.gmra.mxu0 %v473
        %v512 = vpop.f32.mrf.mxu0
        %v513 = vadd.f32 0.0, %v512
        %v514 = vpop.f32.mrf.mxu0
        %v515 = vpop.f32.mrf.mxu0
        %v516 = vpop.f32.mrf.mxu0
        %517 = vdwg.mxu0
        %v518 = vsel %vm324, %v513, -1e+30
        %s519 = scalar_lea.vmem [#allocation2], 8
        %v520 = vld [vmem:[%s519] sm:$0xff]
        %v521 = vsel %vm330, %v518, -inf
        %522 = vmax.xlane.f32.xlu0 %v521
        %v523 = vpop.xlane.xlu0 %522
        %v524 = vmax.f32 %v520, %v523
        %v525 = vsub.f32 %v520, %v524
        %v526 = vmul.f32 %v525, 1.442695
        %v527 = vpow.pop %v526
        %529 = vset.pattern.permute.xlu0 0
        %530 = vperm.xlu0 %529, %v524
        %v531 = vpop.permute.xlu0 %530
        %v533 = vsub.f32 %v518, %v531
        %v534 = vmul.f32 %v533, 1.442695
        %v535 = vpow.pop %v534
        %s536 = scalar_lea.vmem [#allocation3], 8
        %v537 = vld [vmem:[%s536] sm:$0xff]
        %v538 = vmul.f32 %v527, %v537
        %v539 = vsel %vm330, %v535, 0.0
        %540 = vadd.xlane.f32.xlu0 %v539
        %v541 = vpop.xlane.xlu0 %540
        %v542 = vadd.f32 %v538, %v541
        %543 = vst.msk [vmem:[%s536] sm:$0xff] %vm400, %v542
        %s544 = scalar_lea.vmem [#allocation4], 8
        %v545 = vld [vmem:[%s544] sm:$0xff]
        %547 = vset.pattern.permute.xlu0 0
        %548 = vperm.xlu0 %547, %v527
        %v549 = vpop.permute.xlu0 %548
        %v551 = vmul.f32 %v549, %v545
        %v552 = vpack.c.bf16 %v535, %v535
        %553 = vrot.lane.b32.xlu0 %v412, 56
        %v554 = vpop.permute.xlu0 %553
        %v556 = vsel %vm330, %v552, 0
        %v559 = vsel %vm418, %v554, 0
        %561 = vmatprep.subr.bf16.mxu0 0
        %562 = vmatpush1.bf16.msra.mxu0 0
        %563 = vmatprep.subr.bf16.mxu0 0
        %564 = vmatpush1.bf16.msra.mxu0 0
        %565 = vmatprep.subr.bf16.mxu0 0
        %566 = vmatpush1.bf16.msra.mxu0 0
        %567 = vmatprep.subr.bf16.mxu0 0
        %568 = vmatpush1.bf16.msra.mxu0 0
        %569 = vmatprep.subr.bf16.mxu0 0
        %570 = vmatpush1.bf16.msra.mxu0 0
        %571 = vmatprep.subr.bf16.mxu0 0
        %572 = vmatpush1.bf16.msra.mxu0 0
        %573 = vmatprep.subr.bf16.mxu0 0
        %574 = vmatpush1.bf16.msra.mxu0 0
        %575 = vmatprep.subr.bf16.mxu0 0
        %576 = vmatpush1.bf16.msra.mxu0 %v559
        %577 = vmatprep.subr.bf16.mxu0 0
        %578 = vmatpush2.bf16.msra.mxu0 0
        %579 = vmatprep.subr.bf16.mxu0 0
        %580 = vmatpush2.bf16.msra.mxu0 0
        %581 = vmatprep.subr.bf16.mxu0 0
        %582 = vmatpush2.bf16.msra.mxu0 0
        %583 = vmatprep.subr.bf16.mxu0 0
        %584 = vmatpush2.bf16.msra.mxu0 0
        %585 = vmatprep.subr.bf16.mxu0 0
        %586 = vmatpush2.bf16.msra.mxu0 0
        %587 = vmatprep.subr.bf16.mxu0 0
        %588 = vmatpush2.bf16.msra.mxu0 0
        %589 = vmatprep.subr.bf16.mxu0 0
        %590 = vmatpush2.bf16.msra.mxu0 0
        %591 = vmatprep.subr.bf16.mxu0 0
        %592 = vmatpush2.bf16.msra.mxu0 0
        %593 = vmatprep.mubr.bf16.mxu0 0
        %594 = vmatmul.mubr.bf16.gmra.mxu0 %v556
        %v595 = vpop.f32.mrf.mxu0
        %v596 = vadd.f32 0.0, %v595
        %v597 = vpop.f32.mrf.mxu0
        %v598 = vpop.f32.mrf.mxu0
        %v599 = vpop.f32.mrf.mxu0
        %600 = vdwg.mxu0
        %v601 = vadd.f32 %v551, %v596
        %602 = vst.msk [vmem:[%s544] sm:$0xff] %vm330, %v601
        %603 = vst.msk [vmem:[%s519] sm:$0xff] %vm400, %v524
        %604 = vrot.lane.b32.xlu0 %v467, 112
        %v605 = vpop.permute.xlu0 %604
        %606 = vrot.lane.b32.xlu0 %v327, 80
        %v607 = vpop.permute.xlu0 %606
        %v609 = vsel %vm330, %v605, 0
        %v612 = vsel %vm330, %v607, 0
        %614 = vmatprep.subr.bf16.mxu0 0
        %615 = vmatpush1.bf16.xpose.msra.mxu0 0
        %616 = vmatprep.subr.bf16.mxu0 0
        %617 = vmatpush1.bf16.xpose.msra.mxu0 0
        %618 = vmatprep.subr.bf16.mxu0 0
        %619 = vmatpush1.bf16.xpose.msra.mxu0 0
        %620 = vmatprep.subr.bf16.mxu0 0
        %621 = vmatpush1.bf16.xpose.msra.mxu0 0
        %622 = vmatprep.subr.bf16.mxu0 0
        %623 = vmatpush1.bf16.xpose.msra.mxu0 0
        %624 = vmatprep.subr.bf16.mxu0 0
        %625 = vmatpush1.bf16.xpose.msra.mxu0 0
        %626 = vmatprep.subr.bf16.mxu0 0
        %627 = vmatpush1.bf16.xpose.msra.mxu0 0
        %628 = vmatprep.subr.bf16.mxu0 0
        %629 = vmatpush1.bf16.xpose.msra.mxu0 %v612
        %630 = vmatprep.subr.bf16.mxu0 0
        %631 = vmatpush2.bf16.xpose.msra.mxu0 0
        %632 = vmatprep.subr.bf16.mxu0 0
        %633 = vmatpush2.bf16.xpose.msra.mxu0 0
        %634 = vmatprep.subr.bf16.mxu0 0
        %635 = vmatpush2.bf16.xpose.msra.mxu0 0
        %636 = vmatprep.subr.bf16.mxu0 0
        %637 = vmatpush2.bf16.xpose.msra.mxu0 0
        %638 = vmatprep.subr.bf16.mxu0 0
        %639 = vmatpush2.bf16.xpose.msra.mxu0 0
        %640 = vmatprep.subr.bf16.mxu0 0
        %641 = vmatpush2.bf16.xpose.msra.mxu0 0
        %642 = vmatprep.subr.bf16.mxu0 0
        %643 = vmatpush2.bf16.xpose.msra.mxu0 0
        %644 = vmatprep.subr.bf16.mxu0 0
        %645 = vmatpush2.bf16.xpose.msra.mxu0 0
        %646 = vmatprep.mubr.bf16.mxu0 0
        %647 = vmatmul.mubr.bf16.gmra.mxu0 %v609
        %v648 = vpop.f32.mrf.mxu0
        %v649 = vadd.f32 0.0, %v648
        %v650 = vpop.f32.mrf.mxu0
        %v651 = vpop.f32.mrf.mxu0
        %v652 = vpop.f32.mrf.mxu0
        %653 = vdwg.mxu0
        %v654 = vsel %vm324, %v649, -1e+30
        %s655 = scalar_lea.vmem [#allocation2], 16
        %v656 = vld [vmem:[%s655] sm:$0xff]
        %v657 = vsel %vm330, %v654, -inf
        %658 = vmax.xlane.f32.xlu0 %v657
        %v659 = vpop.xlane.xlu0 %658
        %v660 = vmax.f32 %v656, %v659
        %v661 = vsub.f32 %v656, %v660
        %v662 = vmul.f32 %v661, 1.442695
        %v663 = vpow.pop %v662
        %665 = vset.pattern.permute.xlu0 0
        %666 = vperm.xlu0 %665, %v660
        %v667 = vpop.permute.xlu0 %666
        %v669 = vsub.f32 %v654, %v667
        %v670 = vmul.f32 %v669, 1.442695
        %v671 = vpow.pop %v670
        %s672 = scalar_lea.vmem [#allocation3], 16
        %v673 = vld [vmem:[%s672] sm:$0xff]
        %v674 = vmul.f32 %v663, %v673
        %v675 = vsel %vm330, %v671, 0.0
        %676 = vadd.xlane.f32.xlu0 %v675
        %v677 = vpop.xlane.xlu0 %676
        %v678 = vadd.f32 %v674, %v677
        %679 = vst.msk [vmem:[%s672] sm:$0xff] %vm400, %v678
        %s680 = scalar_lea.vmem [#allocation4], 16
        %v681 = vld [vmem:[%s680] sm:$0xff]
        %683 = vset.pattern.permute.xlu0 0
        %684 = vperm.xlu0 %683, %v663
        %v685 = vpop.permute.xlu0 %684
        %v687 = vmul.f32 %v685, %v681
        %v688 = vpack.c.bf16 %v671, %v671
        %689 = vrot.lane.b32.xlu0 %v412, 48
        %v690 = vpop.permute.xlu0 %689
        %v692 = vsel %vm330, %v688, 0
        %v695 = vsel %vm418, %v690, 0
        %697 = vmatprep.subr.bf16.mxu0 0
        %698 = vmatpush1.bf16.msra.mxu0 0
        %699 = vmatprep.subr.bf16.mxu0 0
        %700 = vmatpush1.bf16.msra.mxu0 0
        %701 = vmatprep.subr.bf16.mxu0 0
        %702 = vmatpush1.bf16.msra.mxu0 0
        %703 = vmatprep.subr.bf16.mxu0 0
        %704 = vmatpush1.bf16.msra.mxu0 0
        %705 = vmatprep.subr.bf16.mxu0 0
        %706 = vmatpush1.bf16.msra.mxu0 0
        %707 = vmatprep.subr.bf16.mxu0 0
        %708 = vmatpush1.bf16.msra.mxu0 0
        %709 = vmatprep.subr.bf16.mxu0 0
        %710 = vmatpush1.bf16.msra.mxu0 0
        %711 = vmatprep.subr.bf16.mxu0 0
        %712 = vmatpush1.bf16.msra.mxu0 %v695
        %713 = vmatprep.subr.bf16.mxu0 0
        %714 = vmatpush2.bf16.msra.mxu0 0
        %715 = vmatprep.subr.bf16.mxu0 0
        %716 = vmatpush2.bf16.msra.mxu0 0
        %717 = vmatprep.subr.bf16.mxu0 0
        %718 = vmatpush2.bf16.msra.mxu0 0
        %719 = vmatprep.subr.bf16.mxu0 0
        %720 = vmatpush2.bf16.msra.mxu0 0
        %721 = vmatprep.subr.bf16.mxu0 0
        %722 = vmatpush2.bf16.msra.mxu0 0
        %723 = vmatprep.subr.bf16.mxu0 0
        %724 = vmatpush2.bf16.msra.mxu0 0
        %725 = vmatprep.subr.bf16.mxu0 0
        %726 = vmatpush2.bf16.msra.mxu0 0
        %727 = vmatprep.subr.bf16.mxu0 0
        %728 = vmatpush2.bf16.msra.mxu0 0
        %729 = vmatprep.mubr.bf16.mxu0 0
        %730 = vmatmul.mubr.bf16.gmra.mxu0 %v692
        %v731 = vpop.f32.mrf.mxu0
        %v732 = vadd.f32 0.0, %v731
        %v733 = vpop.f32.mrf.mxu0
        %v734 = vpop.f32.mrf.mxu0
        %v735 = vpop.f32.mrf.mxu0
        %736 = vdwg.mxu0
        %v737 = vadd.f32 %v687, %v732
        %738 = vst.msk [vmem:[%s680] sm:$0xff] %vm330, %v737
        %739 = vst.msk [vmem:[%s655] sm:$0xff] %vm400, %v660
        %740 = vrot.lane.b32.xlu0 %v467, 104
        %v741 = vpop.permute.xlu0 %740
        %742 = vrot.lane.b32.xlu0 %v327, 72
        %v743 = vpop.permute.xlu0 %742
        %v745 = vsel %vm330, %v741, 0
        %v748 = vsel %vm330, %v743, 0
        %750 = vmatprep.subr.bf16.mxu0 0
        %751 = vmatpush1.bf16.xpose.msra.mxu0 0
        %752 = vmatprep.subr.bf16.mxu0 0
        %753 = vmatpush1.bf16.xpose.msra.mxu0 0
        %754 = vmatprep.subr.bf16.mxu0 0
        %755 = vmatpush1.bf16.xpose.msra.mxu0 0
        %756 = vmatprep.subr.bf16.mxu0 0
        %757 = vmatpush1.bf16.xpose.msra.mxu0 0
        %758 = vmatprep.subr.bf16.mxu0 0
        %759 = vmatpush1.bf16.xpose.msra.mxu0 0
        %760 = vmatprep.subr.bf16.mxu0 0
        %761 = vmatpush1.bf16.xpose.msra.mxu0 0
        %762 = vmatprep.subr.bf16.mxu0 0
        %763 = vmatpush1.bf16.xpose.msra.mxu0 0
        %764 = vmatprep.subr.bf16.mxu0 0
        %765 = vmatpush1.bf16.xpose.msra.mxu0 %v748
        %766 = vmatprep.subr.bf16.mxu0 0
        %767 = vmatpush2.bf16.xpose.msra.mxu0 0
        %768 = vmatprep.subr.bf16.mxu0 0
        %769 = vmatpush2.bf16.xpose.msra.mxu0 0
        %770 = vmatprep.subr.bf16.mxu0 0
        %771 = vmatpush2.bf16.xpose.msra.mxu0 0
        %772 = vmatprep.subr.bf16.mxu0 0
        %773 = vmatpush2.bf16.xpose.msra.mxu0 0
        %774 = vmatprep.subr.bf16.mxu0 0
        %775 = vmatpush2.bf16.xpose.msra.mxu0 0
        %776 = vmatprep.subr.bf16.mxu0 0
        %777 = vmatpush2.bf16.xpose.msra.mxu0 0
        %778 = vmatprep.subr.bf16.mxu0 0
        %779 = vmatpush2.bf16.xpose.msra.mxu0 0
        %780 = vmatprep.subr.bf16.mxu0 0
        %781 = vmatpush2.bf16.xpose.msra.mxu0 0
        %782 = vmatprep.mubr.bf16.mxu0 0
        %783 = vmatmul.mubr.bf16.gmra.mxu0 %v745
        %v784 = vpop.f32.mrf.mxu0
        %v785 = vadd.f32 0.0, %v784
        %v786 = vpop.f32.mrf.mxu0
        %v787 = vpop.f32.mrf.mxu0
        %v788 = vpop.f32.mrf.mxu0
        %789 = vdwg.mxu0
        %v790 = vsel %vm324, %v785, -1e+30
        %s791 = scalar_lea.vmem [#allocation2], 24
        %v792 = vld [vmem:[%s791] sm:$0xff]
        %v793 = vsel %vm330, %v790, -inf
        %794 = vmax.xlane.f32.xlu0 %v793
        %v795 = vpop.xlane.xlu0 %794
        %v796 = vmax.f32 %v792, %v795
        %v797 = vsub.f32 %v792, %v796
        %v798 = vmul.f32 %v797, 1.442695
        %v799 = vpow.pop %v798
        %801 = vset.pattern.permute.xlu0 0
        %802 = vperm.xlu0 %801, %v796
        %v803 = vpop.permute.xlu0 %802
        %v805 = vsub.f32 %v790, %v803
        %v806 = vmul.f32 %v805, 1.442695
        %v807 = vpow.pop %v806
        %s808 = scalar_lea.vmem [#allocation3], 24
        %v809 = vld [vmem:[%s808] sm:$0xff]
        %v810 = vmul.f32 %v799, %v809
        %v811 = vsel %vm330, %v807, 0.0
        %812 = vadd.xlane.f32.xlu0 %v811
        %v813 = vpop.xlane.xlu0 %812
        %v814 = vadd.f32 %v810, %v813
        %815 = vst.msk [vmem:[%s808] sm:$0xff] %vm400, %v814
        %s816 = scalar_lea.vmem [#allocation4], 24
        %v817 = vld [vmem:[%s816] sm:$0xff]
        %819 = vset.pattern.permute.xlu0 0
        %820 = vperm.xlu0 %819, %v799
        %v821 = vpop.permute.xlu0 %820
        %v823 = vmul.f32 %v821, %v817
        %v824 = vpack.c.bf16 %v807, %v807
        %825 = vrot.lane.b32.xlu0 %v412, 40
        %v826 = vpop.permute.xlu0 %825
        %v828 = vsel %vm330, %v824, 0
        %v831 = vsel %vm418, %v826, 0
        %833 = vmatprep.subr.bf16.mxu0 0
        %834 = vmatpush1.bf16.msra.mxu0 0
        %835 = vmatprep.subr.bf16.mxu0 0
        %836 = vmatpush1.bf16.msra.mxu0 0
        %837 = vmatprep.subr.bf16.mxu0 0
        %838 = vmatpush1.bf16.msra.mxu0 0
        %839 = vmatprep.subr.bf16.mxu0 0
        %840 = vmatpush1.bf16.msra.mxu0 0
        %841 = vmatprep.subr.bf16.mxu0 0
        %842 = vmatpush1.bf16.msra.mxu0 0
        %843 = vmatprep.subr.bf16.mxu0 0
        %844 = vmatpush1.bf16.msra.mxu0 0
        %845 = vmatprep.subr.bf16.mxu0 0
        %846 = vmatpush1.bf16.msra.mxu0 0
        %847 = vmatprep.subr.bf16.mxu0 0
        %848 = vmatpush1.bf16.msra.mxu0 %v831
        %849 = vmatprep.subr.bf16.mxu0 0
        %850 = vmatpush2.bf16.msra.mxu0 0
        %851 = vmatprep.subr.bf16.mxu0 0
        %852 = vmatpush2.bf16.msra.mxu0 0
        %853 = vmatprep.subr.bf16.mxu0 0
        %854 = vmatpush2.bf16.msra.mxu0 0
        %855 = vmatprep.subr.bf16.mxu0 0
        %856 = vmatpush2.bf16.msra.mxu0 0
        %857 = vmatprep.subr.bf16.mxu0 0
        %858 = vmatpush2.bf16.msra.mxu0 0
        %859 = vmatprep.subr.bf16.mxu0 0
        %860 = vmatpush2.bf16.msra.mxu0 0
        %861 = vmatprep.subr.bf16.mxu0 0
        %862 = vmatpush2.bf16.msra.mxu0 0
        %863 = vmatprep.subr.bf16.mxu0 0
        %864 = vmatpush2.bf16.msra.mxu0 0
        %865 = vmatprep.mubr.bf16.mxu0 0
        %866 = vmatmul.mubr.bf16.gmra.mxu0 %v828
        %v867 = vpop.f32.mrf.mxu0
        %v868 = vadd.f32 0.0, %v867
        %v869 = vpop.f32.mrf.mxu0
        %v870 = vpop.f32.mrf.mxu0
        %v871 = vpop.f32.mrf.mxu0
        %872 = vdwg.mxu0
        %v873 = vadd.f32 %v823, %v868
        %874 = vst.msk [vmem:[%s816] sm:$0xff] %vm330, %v873
        %875 = vst.msk [vmem:[%s791] sm:$0xff] %vm400, %v796
      $region40: #{multi_head_atten.4} parent=31 // pred_fallthru
        _
      // Predicated region
      $region41: #{multi_head_atten.4} parent=31 // pred_check
        %p876 = pneg %p289
      $region42: #{multi_head_atten.4} parent=31 // pred_check_branch
        %878 = sbr.rel (%p876) target = $region44
      $region43: #{multi_head_atten.4} parent=31 // pred_region
        %v879 = vld [vmem:[#allocation3] sm:$0xff]
        %v880 = vrcp.pop %v879
        %v881 = vld [vmem:[#allocation4] sm:$0xff]
        %883 = vset.pattern.permute.xlu0 0
        %884 = vperm.xlu0 %883, %v880
        %v885 = vpop.permute.xlu0 %884
        %v887 = vmul.f32 %v881, %v885
        %s888 = scalar_lea.vmem [#allocation3], 8
        %v889 = vld [vmem:[%s888] sm:$0xff]
        %v890 = vrcp.pop %v889
        %s891 = scalar_lea.vmem [#allocation4], 8
        %v892 = vld [vmem:[%s891] sm:$0xff]
        %894 = vset.pattern.permute.xlu0 0
        %895 = vperm.xlu0 %894, %v890
        %v896 = vpop.permute.xlu0 %895
        %v898 = vmul.f32 %v892, %v896
        %s899 = scalar_lea.vmem [#allocation3], 16
        %v900 = vld [vmem:[%s899] sm:$0xff]
        %v901 = vrcp.pop %v900
        %s902 = scalar_lea.vmem [#allocation4], 16
        %v903 = vld [vmem:[%s902] sm:$0xff]
        %905 = vset.pattern.permute.xlu0 0
        %906 = vperm.xlu0 %905, %v901
        %v907 = vpop.permute.xlu0 %906
        %v909 = vmul.f32 %v903, %v907
        %s910 = scalar_lea.vmem [#allocation3], 24
        %v911 = vld [vmem:[%s910] sm:$0xff]
        %v912 = vrcp.pop %v911
        %s913 = scalar_lea.vmem [#allocation4], 24
        %v914 = vld [vmem:[%s913] sm:$0xff]
        %916 = vset.pattern.permute.xlu0 0
        %917 = vperm.xlu0 %916, %v912
        %v918 = vpop.permute.xlu0 %917
        %v920 = vmul.f32 %v914, %v918
        %922 = vrot.lane.b32.xlu0 %v898, 8
        %v923 = vpop.permute.xlu0 %922
        %926 = vrot.lane.b32.xlu0 %v909, 16
        %v927 = vpop.permute.xlu0 %926
        %930 = vrot.lane.b32.xlu0 %v920, 24
        %v931 = vpop.permute.xlu0 %930
        %vm933 = vcmask 64512
        %v934 = vsel %vm933, %v887, %v923
        %vm935 = vcmask 130048
        %v936 = vsel %vm935, %v934, %v927
        %vm937 = vcmask 195584
        %v938 = vsel %vm937, %v936, %v931
        %v939 = vpack.c.bf16 %v938, %v938
        %vm940 = vcmask 257024
        %941 = vst.msk [vmem:[%s287] sm:$0xf] %vm940, %v939
      $region44: #{multi_head_atten.4} parent=31 // pred_fallthru
        _
      %p942 = scmp.lt.s32.totalorder %s19, 1
      %s943 = scalar_select %p942, %s19, 1
      %p944 = scmp.lt.s32.totalorder %s20, 0
      %s945 = scalar_select %p944, %s20, 0
      %s946 = sadd.s32 %s945, %s943
      %s947 = smul.addr %s946, 4
      %s948 = scalar_lea.vmem %s3, %s947
      // Predicated region
      $region45: #{multi_head_atten.4} parent=31 // pred_check
        %p949 = pneg %p145
      $region46: #{multi_head_atten.4} parent=31 // pred_check_branch
        %951 = sbr.rel (%p949) target = $region48
      $region47: #{multi_head_atten.4} parent=31 // pred_region
        _
      $region48: #{multi_head_atten.4} parent=31 // pred_fallthru
        _
    $region32: #{multi_head_atten.4} parent=5 // pred_fallthru
      _
    %p952 = scmp.le.s32.totalorder 2, %s9
    // Predicated region
    $region49: #{multi_head_atten.4} parent=5 // pred_check
      %p953 = pneg %p952
    $region50: #{multi_head_atten.4} parent=5 // pred_check_branch
      %955 = sbr.rel (%p953) target = $region52
    $region51: #{multi_head_atten.4} parent=5 // pred_region
      %s956 = ssub.s32 %s9, 2
      // Predicated region
      $region53: #{multi_head_atten.4} parent=51 // pred_check
        %p957 = pneg %p151
      $region54: #{multi_head_atten.4} parent=51 // pred_check_branch
        %959 = sbr.rel (%p957) target = $region56
      $region55: #{multi_head_atten.4} parent=51 // pred_region
        %p960 = scmp.lt.s32.totalorder %s22, 1
        %s961 = scalar_select %p960, %s22, 1
        %p962 = scmp.lt.s32.totalorder %s23, 0
        %s963 = scalar_select %p962, %s23, 0
        %s964 = sadd.s32 %s963, %s961
        %s965 = smul.addr %s964, 4
        %s966 = scalar_lea.vmem %s3, %s965
      $region56: #{multi_head_atten.4} parent=51 // pred_fallthru
        _
    $region52: #{multi_head_atten.4} parent=5 // pred_fallthru
      _
  $region6: #{multi_head_atten.4} parent=0 // loop_footer
    %s13 = sadd.s32 1, %s9
  $region7: #{multi_head_atten.4} parent=0 // loop_footer_branch
    %8 = sbr.rel target = $region3
  $region8: #{multi_head_atten.4} parent=0 // loop_exit
    _

</llo_original>
